<compile_context>
chip_gen: v5e
topology: v5e:2x2
jax: 0.10.0
libtpu: 0.0.40
codegen_flags: <defaults>
</compile_context>

<pallas_src>
import functools

import jax
import jax.numpy as jnp
import numpy as np
from jax.experimental import pallas as pl
from jax.experimental.pallas import tpu as pltpu


_SQRT1_2 = 0.7071067811865476
_LN_EPS = 1e-5  # torch.nn.LayerNorm default


def _gelu(y):
    # exact (erf-based) GELU == torch.nn.GELU() default
    return 0.5 * y * (1.0 + jax.lax.erf(y * _SQRT1_2))


def _layernorm(y, gamma, beta):
    mu = jnp.mean(y, axis=-1, keepdims=True)
    var = jnp.mean((y - mu) ** 2, axis=-1, keepdims=True)
    return (y - mu) * jax.lax.rsqrt(var + _LN_EPS) * gamma + beta


# ----------------------------------------------------------------------------
# Fused forward kernel: whole Net.__get_features + CrossEntropy, one invocation
# ----------------------------------------------------------------------------
def _fused_net_kernel(n_src,
                      x_ref, onehot_ref, eps_ref,
                      wb_ref, bb_ref,
                      zw1_ref, zb1_ref, zg1_ref, zbe1_ref,
                      zwm_ref, zbm_ref, zwl_ref, zbl_ref,
                      rw1_ref, rb1_ref, rw2_ref, rb2_ref,
                      cw1_ref, cb1_ref, cg1_ref, cbe1_ref,
                      cw2_ref, cb2_ref,
                      loss_ref, logits_ref, rec_ref):
    x = x_ref[...]                                                    # (2B, S*F)

    # BackBone.enc_embedding folded into a block-diagonal weight (== per-segment
    # Linear), so the z_net input enc_out.reshape(B, S*D) is one lane-dense matmul.
    zf = jnp.dot(x, wb_ref[...], preferred_element_type=jnp.float32) + bb_ref[...]
    # TODO(synk): cfg.No_encoder=True — the transformer Encoder stack
    # (Encoder/EncoderLayer/AttentionLayer/FullAttention) is skipped, exactly as
    # in BackBone.forward; those classes are not part of the provided source.

    # --- z_net (Base_Net type2, is_mean_std=True): Linear -> GELU -> LN -> Linear ---
    h = _gelu(jnp.dot(zf, zw1_ref[...], preferred_element_type=jnp.float32) + zb1_ref[...])
    h = _layernorm(h, zg1_ref[...], zbe1_ref[...])
    # head columns pre-permuted (wrapper) into [all means | all logvars]:
    z_mean = jnp.dot(h, zwm_ref[...], preferred_element_type=jnp.float32) + zbm_ref[...]
    z_logvar = jnp.dot(h, zwl_ref[...], preferred_element_type=jnp.float32) + zbl_ref[...]

    # --- reparametrize: z = mu + exp(0.5*logvar) * eps   (flattened (2B, S*Z)) ---
    z = z_mean + jnp.exp(0.5 * z_logvar) * eps_ref[...]
    # TODO(synk): eps is drawn with jax.random.normal in the jitted wrapper (one
    # tiny input); could move fully on-chip with pltpu.prng_seed/prng_random_bits.

    # --- rec_net (type2, layer_norm=False): Linear -> GELU -> Linear ---
    r1 = _gelu(jnp.dot(z, rw1_ref[...], preferred_element_type=jnp.float32) + rb1_ref[...])
    rec_ref[...] = jnp.dot(r1, rw2_ref[...], preferred_element_type=jnp.float32) + rb2_ref[...]

    # --- class_net (type2): Linear -> GELU -> LN -> Linear ---
    c1 = _gelu(jnp.dot(z, cw1_ref[...], preferred_element_type=jnp.float32) + cb1_ref[...])
    c1 = _layernorm(c1, cg1_ref[...], cbe1_ref[...])
    logits = jnp.dot(c1, cw2_ref[...], preferred_element_type=jnp.float32) + cb2_ref[...]
    logits_ref[...] = logits

    # --- CrossEntropyLoss(reduction='mean') over the first n_src rows (source) ---
    m = jnp.max(logits, axis=-1, keepdims=True)
    lse = jnp.log(jnp.sum(jnp.exp(logits - m), axis=-1, keepdims=True)) + m
    tgt = jnp.sum(onehot_ref[...] * logits, axis=-1, keepdims=True)
    row = jax.lax.broadcasted_iota(jnp.int32, lse.shape, 0)
    w = jnp.where(row < n_src, 1.0 / n_src, 0.0)
    loss_ref[...] = jnp.sum(w * (lse - tgt), axis=0, keepdims=True)   # (1, 1)


_WEIGHT_ORDER = ("wb", "bb",
                 "z_w1", "z_b1", "z_g1", "z_be1",
                 "z_wm", "z_bm", "z_wl", "z_bl",
                 "r_w1", "r_b1", "r_w2", "r_b2",
                 "c_w1", "c_b1", "c_g1", "c_be1", "c_w2", "c_b2")


def _fused_forward_call(fp, x2d, onehot, eps, n_src):
    B2 = x2d.shape[0]
    C = fp["c_w2"].shape[1]
    SF = fp["r_w2"].shape[1]
    n_inputs = 3 + len(_WEIGHT_ORDER)
    return pl.pallas_call(
        functools.partial(_fused_net_kernel, n_src),
        out_shape=(
            jax.ShapeDtypeStruct((1, 1), jnp.float32),     # mean source CE loss
            jax.ShapeDtypeStruct((B2, C), jnp.float32),    # class logits (src rows first)
            jax.ShapeDtypeStruct((B2, SF), jnp.float32),   # reconstruction, flattened
        ),
        in_specs=[pl.BlockSpec(memory_space=pltpu.MemorySpace.VMEM)] * n_inputs,
        out_specs=(pl.BlockSpec(memory_space=pltpu.MemorySpace.VMEM),) * 3,
    )(x2d, onehot, eps, *[fp[k] for k in _WEIGHT_ORDER])


# ----------------------------------------------------------------------------
# Config + parameters
# ----------------------------------------------------------------------------
class Config:
    feature_dim = 16
    d_model = 32
    num_segments = 8
    z_dim = 4
    num_class = 4
    layer_nums = 2
    dropout_rate = 0.0
    activation = "gelu"
    is_ln = True
    No_encoder = True
    No_prior = True          # -> no_kl=True path in __loss_function
    class_weight = 1.0
    rec_weight = 1.0
    sparsity_weight = 1.0
    z_kl_weight = 1.0
    structure_weight = 1.0
    start_psuedo_step = 10**9
    lags = 1


def init_params(key, cfg):
    S, F, D, Z, C = (cfg.num_segments, cfg.feature_dim, cfg.d_model,
                     cfg.z_dim, cfg.num_class)
    ks = jax.random.split(key, 8)
    scale = 0.05

    def w(k, shape):
        return scale * jax.random.normal(k, shape, jnp.float32)

    p = {}
    # BackBone.enc_embedding : Linear(feature_dim, d_model)
    p["emb_w"] = w(ks[0], (F, D))
    p["emb_b"] = jnp.zeros((D,), jnp.float32)
    # z_net (type2, is_mean_std=True): Linear(S*D,S*D) -> GELU -> LN -> Linear(S*D, 2*Z*S)
    p["z_w1"] = w(ks[1], (S * D, S * D))
    p["z_b1"] = jnp.zeros((S * D,), jnp.float32)
    p["z_g1"] = jnp.ones((S * D,), jnp.float32)
    p["z_be1"] = jnp.zeros((S * D,), jnp.float32)
    p["z_w2"] = w(ks[2], (S * D, Z * S * 2))
    p["z_b2"] = jnp.zeros((Z * S * 2,), jnp.float32)
    # class_net (type2, radio=1): Linear(S*Z,4*Z) -> GELU -> LN -> Linear(4*Z, C)
    p["c_w1"] = w(ks[3], (S * Z, 4 * Z))
    p["c_b1"] = jnp.zeros((4 * Z,), jnp.float32)
    p["c_g1"] = jnp.ones((4 * Z,), jnp.float32)
    p["c_be1"] = jnp.zeros((4 * Z,), jnp.float32)
    p["c_w2"] = w(ks[4], (4 * Z, C))
    p["c_b2"] = jnp.zeros((C,), jnp.float32)
    # rec_net (type2, radio=1, layer_norm=False): Linear(S*Z,2*D*S) -> GELU -> Linear(2*D*S, F*S)
    p["r_w1"] = w(ks[5], (S * Z, 2 * D * S))
    p["r_b1"] = jnp.zeros((2 * D * S,), jnp.float32)
    p["r_w2"] = w(ks[6], (2 * D * S, F * S))
    p["r_b2"] = jnp.zeros((F * S,), jnp.float32)
    return p


def pack_fused_params(params, cfg):
    """One-time parameter packing for the fused kernel (done outside the hot path)."""
    S, D, Z = cfg.num_segments, cfg.d_model, cfg.z_dim
    fp = {}
    # Per-segment enc_embedding Linear -> block-diagonal (S*F, S*D) weight, so
    # x.reshape(2B, S*F) @ wb == enc_embedding(x).reshape(2B, S*D)   (z_net input).
    fp["wb"] = jnp.kron(jnp.eye(S, dtype=jnp.float32), params["emb_w"])
    fp["bb"] = jnp.tile(params["emb_b"], S).reshape(1, S * D)
    fp["z_w1"] = params["z_w1"]
    fp["z_b1"] = params["z_b1"].reshape(1, -1)
    fp["z_g1"] = params["z_g1"].reshape(1, -1)
    fp["z_be1"] = params["z_be1"].reshape(1, -1)
    # torch: reshape(B,S,2Z) + chunk(dim=2) -> column s*2Z+j is mean, s*2Z+Z+j is logvar.
    idx = np.arange(S * 2 * Z).reshape(S, 2, Z)
    mean_cols = idx[:, 0, :].reshape(-1)
    logv_cols = idx[:, 1, :].reshape(-1)
    fp["z_wm"] = params["z_w2"][:, mean_cols]
    fp["z_bm"] = params["z_b2"][mean_cols].reshape(1, -1)
    fp["z_wl"] = params["z_w2"][:, logv_cols]
    fp["z_bl"] = params["z_b2"][logv_cols].reshape(1, -1)
    fp["r_w1"] = params["r_w1"]
    fp["r_b1"] = params["r_b1"].reshape(1, -1)
    fp["r_w2"] = params["r_w2"]
    fp["r_b2"] = params["r_b2"].reshape(1, -1)
    fp["c_w1"] = params["c_w1"]
    fp["c_b1"] = params["c_b1"].reshape(1, -1)
    fp["c_g1"] = params["c_g1"].reshape(1, -1)
    fp["c_be1"] = params["c_be1"].reshape(1, -1)
    fp["c_w2"] = params["c_w2"]
    fp["c_b2"] = params["c_b2"].reshape(1, -1)
    return fp


# ----------------------------------------------------------------------------
# net_forward (mirrors Net.forward with No_encoder=True, No_prior=True)
# ----------------------------------------------------------------------------
def make_net_forward(cfg):
    C = cfg.num_class

    def fwd(fp, source_data, target_data, src_label, epoch, noise_key):
        del epoch  # epoch <= start_psuedo_step -> pseudo-label branch not taken
        B, S, F = source_data.shape
        Z = cfg.z_dim
        # Single batched pass: source and target concatenated along batch (B -> 2B).
        x2d = jnp.concatenate([source_data, target_data], axis=0).reshape(2 * B, S * F)
        onehot = jnp.concatenate(
            [jax.nn.one_hot(src_label, C, dtype=jnp.float32),
             jnp.zeros((B, C), jnp.float32)], axis=0)
        eps = jax.random.normal(noise_key, (2 * B, S * Z), jnp.float32)

        loss11, _logits, _rec2d = _fused_forward_call(fp, x2d, onehot, eps, n_src=B)
        class_loss = loss11[0, 0]
        # TODO(synk): pseudo-label branch uses conf_mask.any().item() (host-side
        # data-dependent control flow); disabled via start_psuedo_step.

        # no_kl=True (cfg.No_prior): rec / sparsity / kld / structure losses are 0.
        zero = jnp.zeros((), jnp.float32)
        rec_loss = zero
        sparsity_loss = zero
        kld_loss = zero
        structure_loss = zero
        # TODO(synk): NPTransitionPrior (torch.func.jacfwd / quantile / boolean-mask
        # structure loss) is only reached when No_prior=False; skipped per config.

        loss = (class_loss * cfg.class_weight + rec_loss * cfg.rec_weight
                + sparsity_loss * cfg.sparsity_weight + kld_loss * cfg.z_kl_weight
                + structure_loss * cfg.structure_weight)
        return {"total_loss": loss, "c_loss": class_loss, "rec_loss": rec_loss,
                "sparsity_loss": sparsity_loss, "structure_loss": structure_loss,
                "kld_loss": kld_loss}

    return jax.jit(fwd)


# ----------------------------------------------------------------------------
if __name__ == "__main__":
    cfg = Config()
    root = jax.random.PRNGKey(0)
    k_par, k_src, k_tgt, k_lab, k_eps = jax.random.split(root, 5)

    params = init_params(k_par, cfg)
    fused_params = pack_fused_params(params, cfg)

    B = 2
    source_data = jax.random.normal(k_src, (B, cfg.num_segments, cfg.feature_dim),
                                    jnp.float32)
    target_data = jax.random.normal(k_tgt, (B, cfg.num_segments, cfg.feature_dim),
                                    jnp.float32)
    src_label = jax.random.randint(k_lab, (B,), 0, cfg.num_class)

    net_forward = make_net_forward(cfg)
    out = net_forward(fused_params, source_data, target_data, src_label, 0, k_eps)
    out = jax.block_until_ready(out)
    print("KERNEL_OK")
</pallas_src>

<mosaic_0001>
module attributes {stable_mosaic.version = 11 : i64} {
  func.func @_fused_net_kernel(%arg0: memref<4x128xf32, #tpu.memory_space<vmem>>, %arg1: memref<4x4xf32, #tpu.memory_space<vmem>>, %arg2: memref<4x32xf32, #tpu.memory_space<vmem>>, %arg3: memref<128x256xf32, #tpu.memory_space<vmem>>, %arg4: memref<1x256xf32, #tpu.memory_space<vmem>>, %arg5: memref<256x256xf32, #tpu.memory_space<vmem>>, %arg6: memref<1x256xf32, #tpu.memory_space<vmem>>, %arg7: memref<1x256xf32, #tpu.memory_space<vmem>>, %arg8: memref<1x256xf32, #tpu.memory_space<vmem>>, %arg9: memref<256x32xf32, #tpu.memory_space<vmem>>, %arg10: memref<1x32xf32, #tpu.memory_space<vmem>>, %arg11: memref<256x32xf32, #tpu.memory_space<vmem>>, %arg12: memref<1x32xf32, #tpu.memory_space<vmem>>, %arg13: memref<32x512xf32, #tpu.memory_space<vmem>>, %arg14: memref<1x512xf32, #tpu.memory_space<vmem>>, %arg15: memref<512x128xf32, #tpu.memory_space<vmem>>, %arg16: memref<1x128xf32, #tpu.memory_space<vmem>>, %arg17: memref<32x16xf32, #tpu.memory_space<vmem>>, %arg18: memref<1x16xf32, #tpu.memory_space<vmem>>, %arg19: memref<1x16xf32, #tpu.memory_space<vmem>>, %arg20: memref<1x16xf32, #tpu.memory_space<vmem>>, %arg21: memref<16x4xf32, #tpu.memory_space<vmem>>, %arg22: memref<1x4xf32, #tpu.memory_space<vmem>>, %arg23: memref<1x1xf32, #tpu.memory_space<vmem>>, %arg24: memref<4x4xf32, #tpu.memory_space<vmem>>, %arg25: memref<4x128xf32, #tpu.memory_space<vmem>>) attributes {dimension_semantics = [], scalar_prefetch = 0 : i64, scratch_operands = 0 : i64, tpu.core_type = #tpu.core_type<tc>} {
    %c0 = arith.constant 0 : index
    %c0_0 = arith.constant 0 : index
    %0 = vector.load %arg0[%c0, %c0_0] : memref<4x128xf32, #tpu.memory_space<vmem>>, vector<4x128xf32>
    %c0_1 = arith.constant 0 : index
    %c0_2 = arith.constant 0 : index
    %1 = vector.load %arg3[%c0_1, %c0_2] : memref<128x256xf32, #tpu.memory_space<vmem>>, vector<128x256xf32>
    %cst = arith.constant dense<0.000000e+00> : vector<4x256xf32>
    %2 = tpu.matmul %0, %1, %cst {dimension_numbers = #tpu.dot_dimension_numbers<[1], [0], [0], [1], [0, 0, 1, 1], [], []>} : vector<4x128xf32>, vector<128x256xf32>, vector<4x256xf32> -> vector<4x256xf32>
    %c0_3 = arith.constant 0 : index
    %c0_4 = arith.constant 0 : index
    %3 = vector.load %arg4[%c0_3, %c0_4] : memref<1x256xf32, #tpu.memory_space<vmem>>, vector<1x256xf32>
    %4 = vector.broadcast %3 : vector<1x256xf32> to vector<4x256xf32>
    %5 = arith.addf %2, %4 : vector<4x256xf32>
    %c0_5 = arith.constant 0 : index
    %c0_6 = arith.constant 0 : index
    %6 = vector.load %arg5[%c0_5, %c0_6] : memref<256x256xf32, #tpu.memory_space<vmem>>, vector<256x256xf32>
    %cst_7 = arith.constant dense<0.000000e+00> : vector<4x256xf32>
    %7 = tpu.matmul %5, %6, %cst_7 {dimension_numbers = #tpu.dot_dimension_numbers<[1], [0], [0], [1], [0, 0, 1, 1], [], []>} : vector<4x256xf32>, vector<256x256xf32>, vector<4x256xf32> -> vector<4x256xf32>
    %c0_8 = arith.constant 0 : index
    %c0_9 = arith.constant 0 : index
    %8 = vector.load %arg6[%c0_8, %c0_9] : memref<1x256xf32, #tpu.memory_space<vmem>>, vector<1x256xf32>
    %9 = vector.broadcast %8 : vector<1x256xf32> to vector<4x256xf32>
    %10 = arith.addf %7, %9 : vector<4x256xf32>
    %cst_10 = arith.constant 5.000000e-01 : f32
    %11 = vector.broadcast %cst_10 : f32 to vector<4x256xf32>
    %12 = arith.mulf %11, %10 : vector<4x256xf32>
    %cst_11 = arith.constant 0.707106769 : f32
    %13 = vector.broadcast %cst_11 : f32 to vector<4x256xf32>
    %14 = arith.mulf %10, %13 : vector<4x256xf32>
    %15 = math.erf %14 : vector<4x256xf32>
    %cst_12 = arith.constant 1.000000e+00 : f32
    %16 = vector.broadcast %cst_12 : f32 to vector<4x256xf32>
    %17 = arith.addf %16, %15 : vector<4x256xf32>
    %18 = arith.mulf %12, %17 : vector<4x256xf32>
    %c0_13 = arith.constant 0 : index
    %c0_14 = arith.constant 0 : index
    %19 = vector.load %arg7[%c0_13, %c0_14] : memref<1x256xf32, #tpu.memory_space<vmem>>, vector<1x256xf32>
    %c0_15 = arith.constant 0 : index
    %c0_16 = arith.constant 0 : index
    %20 = vector.load %arg8[%c0_15, %c0_16] : memref<1x256xf32, #tpu.memory_space<vmem>>, vector<1x256xf32>
    %cst_17 = arith.constant dense<0.000000e+00> : vector<4xf32>
    %21 = vector.multi_reduction <add>, %18, %cst_17 [1] : vector<4x256xf32> to vector<4xf32>
    %22 = vector.shape_cast %21 : vector<4xf32> to vector<4x1xf32>
    %cst_18 = arith.constant 2.560000e+02 : f32
    %23 = vector.broadcast %cst_18 : f32 to vector<4x1xf32>
    %24 = arith.divf %22, %23 : vector<4x1xf32>
    %25 = vector.broadcast %24 : vector<4x1xf32> to vector<4x256xf32>
    %26 = arith.subf %18, %25 : vector<4x256xf32>
    %27 = arith.mulf %26, %26 : vector<4x256xf32>
    %cst_19 = arith.constant dense<0.000000e+00> : vector<4xf32>
    %28 = vector.multi_reduction <add>, %27, %cst_19 [1] : vector<4x256xf32> to vector<4xf32>
    %29 = vector.shape_cast %28 : vector<4xf32> to vector<4x1xf32>
    %cst_20 = arith.constant 2.560000e+02 : f32
    %30 = vector.broadcast %cst_20 : f32 to vector<4x1xf32>
    %31 = arith.divf %29, %30 : vector<4x1xf32>
    %32 = vector.broadcast %24 : vector<4x1xf32> to vector<4x256xf32>
    %33 = arith.subf %18, %32 : vector<4x256xf32>
    %cst_21 = arith.constant 9.99999974E-6 : f32
    %34 = vector.broadcast %cst_21 : f32 to vector<4x1xf32>
    %35 = arith.addf %31, %34 : vector<4x1xf32>
    %36 = math.rsqrt %35 : vector<4x1xf32>
    %37 = vector.broadcast %36 : vector<4x1xf32> to vector<4x256xf32>
    %38 = arith.mulf %33, %37 : vector<4x256xf32>
    %39 = vector.broadcast %19 : vector<1x256xf32> to vector<4x256xf32>
    %40 = arith.mulf %38, %39 : vector<4x256xf32>
    %41 = vector.broadcast %20 : vector<1x256xf32> to vector<4x256xf32>
    %42 = arith.addf %40, %41 : vector<4x256xf32>
    %c0_22 = arith.constant 0 : index
    %c0_23 = arith.constant 0 : index
    %43 = vector.load %arg9[%c0_22, %c0_23] : memref<256x32xf32, #tpu.memory_space<vmem>>, vector<256x32xf32>
    %cst_24 = arith.constant dense<0.000000e+00> : vector<4x32xf32>
    %44 = tpu.matmul %42, %43, %cst_24 {dimension_numbers = #tpu.dot_dimension_numbers<[1], [0], [0], [1], [0, 0, 1, 1], [], []>} : vector<4x256xf32>, vector<256x32xf32>, vector<4x32xf32> -> vector<4x32xf32>
    %c0_25 = arith.constant 0 : index
    %c0_26 = arith.constant 0 : index
    %45 = vector.load %arg10[%c0_25, %c0_26] : memref<1x32xf32, #tpu.memory_space<vmem>>, vector<1x32xf32>
    %46 = vector.broadcast %45 : vector<1x32xf32> to vector<4x32xf32>
    %47 = arith.addf %44, %46 : vector<4x32xf32>
    %c0_27 = arith.constant 0 : index
    %c0_28 = arith.constant 0 : index
    %48 = vector.load %arg11[%c0_27, %c0_28] : memref<256x32xf32, #tpu.memory_space<vmem>>, vector<256x32xf32>
    %cst_29 = arith.constant dense<0.000000e+00> : vector<4x32xf32>
    %49 = tpu.matmul %42, %48, %cst_29 {dimension_numbers = #tpu.dot_dimension_numbers<[1], [0], [0], [1], [0, 0, 1, 1], [], []>} : vector<4x256xf32>, vector<256x32xf32>, vector<4x32xf32> -> vector<4x32xf32>
    %c0_30 = arith.constant 0 : index
    %c0_31 = arith.constant 0 : index
    %50 = vector.load %arg12[%c0_30, %c0_31] : memref<1x32xf32, #tpu.memory_space<vmem>>, vector<1x32xf32>
    %51 = vector.broadcast %50 : vector<1x32xf32> to vector<4x32xf32>
    %52 = arith.addf %49, %51 : vector<4x32xf32>
    %cst_32 = arith.constant 5.000000e-01 : f32
    %53 = vector.broadcast %cst_32 : f32 to vector<4x32xf32>
    %54 = arith.mulf %53, %52 : vector<4x32xf32>
    %55 = math.exp %54 : vector<4x32xf32>
    %c0_33 = arith.constant 0 : index
    %c0_34 = arith.constant 0 : index
    %56 = vector.load %arg2[%c0_33, %c0_34] : memref<4x32xf32, #tpu.memory_space<vmem>>, vector<4x32xf32>
    %57 = arith.mulf %55, %56 : vector<4x32xf32>
    %58 = arith.addf %47, %57 : vector<4x32xf32>
    %c0_35 = arith.constant 0 : index
    %c0_36 = arith.constant 0 : index
    %59 = vector.load %arg13[%c0_35, %c0_36] : memref<32x512xf32, #tpu.memory_space<vmem>>, vector<32x512xf32>
    %cst_37 = arith.constant dense<0.000000e+00> : vector<4x512xf32>
    %60 = tpu.matmul %58, %59, %cst_37 {dimension_numbers = #tpu.dot_dimension_numbers<[1], [0], [0], [1], [0, 0, 1, 1], [], []>} : vector<4x32xf32>, vector<32x512xf32>, vector<4x512xf32> -> vector<4x512xf32>
    %c0_38 = arith.constant 0 : index
    %c0_39 = arith.constant 0 : index
    %61 = vector.load %arg14[%c0_38, %c0_39] : memref<1x512xf32, #tpu.memory_space<vmem>>, vector<1x512xf32>
    %62 = vector.broadcast %61 : vector<1x512xf32> to vector<4x512xf32>
    %63 = arith.addf %60, %62 : vector<4x512xf32>
    %cst_40 = arith.constant 5.000000e-01 : f32
    %64 = vector.broadcast %cst_40 : f32 to vector<4x512xf32>
    %65 = arith.mulf %64, %63 : vector<4x512xf32>
    %cst_41 = arith.constant 0.707106769 : f32
    %66 = vector.broadcast %cst_41 : f32 to vector<4x512xf32>
    %67 = arith.mulf %63, %66 : vector<4x512xf32>
    %68 = math.erf %67 : vector<4x512xf32>
    %cst_42 = arith.constant 1.000000e+00 : f32
    %69 = vector.broadcast %cst_42 : f32 to vector<4x512xf32>
    %70 = arith.addf %69, %68 : vector<4x512xf32>
    %71 = arith.mulf %65, %70 : vector<4x512xf32>
    %c0_43 = arith.constant 0 : index
    %c0_44 = arith.constant 0 : index
    %72 = vector.load %arg15[%c0_43, %c0_44] : memref<512x128xf32, #tpu.memory_space<vmem>>, vector<512x128xf32>
    %cst_45 = arith.constant dense<0.000000e+00> : vector<4x128xf32>
    %73 = tpu.matmul %71, %72, %cst_45 {dimension_numbers = #tpu.dot_dimension_numbers<[1], [0], [0], [1], [0, 0, 1, 1], [], []>} : vector<4x512xf32>, vector<512x128xf32>, vector<4x128xf32> -> vector<4x128xf32>
    %c0_46 = arith.constant 0 : index
    %c0_47 = arith.constant 0 : index
    %74 = vector.load %arg16[%c0_46, %c0_47] : memref<1x128xf32, #tpu.memory_space<vmem>>, vector<1x128xf32>
    %75 = vector.broadcast %74 : vector<1x128xf32> to vector<4x128xf32>
    %76 = arith.addf %73, %75 : vector<4x128xf32>
    %c0_48 = arith.constant 0 : index
    %c0_49 = arith.constant 0 : index
    %77 = vector.load %arg25[%c0_48, %c0_49] : memref<4x128xf32, #tpu.memory_space<vmem>>, vector<4x128xf32>
    tpu.vector_store %arg25[%c0_48, %c0_49], %76 {strides = array<i32>} : memref<4x128xf32, #tpu.memory_space<vmem>>, vector<4x128xf32>,
    %c0_50 = arith.constant 0 : index
    %c0_51 = arith.constant 0 : index
    %78 = vector.load %arg17[%c0_50, %c0_51] : memref<32x16xf32, #tpu.memory_space<vmem>>, vector<32x16xf32>
    %cst_52 = arith.constant dense<0.000000e+00> : vector<4x16xf32>
    %79 = tpu.matmul %58, %78, %cst_52 {dimension_numbers = #tpu.dot_dimension_numbers<[1], [0], [0], [1], [0, 0, 1, 1], [], []>} : vector<4x32xf32>, vector<32x16xf32>, vector<4x16xf32> -> vector<4x16xf32>
    %c0_53 = arith.constant 0 : index
    %c0_54 = arith.constant 0 : index
    %80 = vector.load %arg18[%c0_53, %c0_54] : memref<1x16xf32, #tpu.memory_space<vmem>>, vector<1x16xf32>
    %81 = vector.broadcast %80 : vector<1x16xf32> to vector<4x16xf32>
    %82 = arith.addf %79, %81 : vector<4x16xf32>
    %cst_55 = arith.constant 5.000000e-01 : f32
    %83 = vector.broadcast %cst_55 : f32 to vector<4x16xf32>
    %84 = arith.mulf %83, %82 : vector<4x16xf32>
    %cst_56 = arith.constant 0.707106769 : f32
    %85 = vector.broadcast %cst_56 : f32 to vector<4x16xf32>
    %86 = arith.mulf %82, %85 : vector<4x16xf32>
    %87 = math.erf %86 : vector<4x16xf32>
    %cst_57 = arith.constant 1.000000e+00 : f32
    %88 = vector.broadcast %cst_57 : f32 to vector<4x16xf32>
    %89 = arith.addf %88, %87 : vector<4x16xf32>
    %90 = arith.mulf %84, %89 : vector<4x16xf32>
    %c0_58 = arith.constant 0 : index
    %c0_59 = arith.constant 0 : index
    %91 = vector.load %arg19[%c0_58, %c0_59] : memref<1x16xf32, #tpu.memory_space<vmem>>, vector<1x16xf32>
    %c0_60 = arith.constant 0 : index
    %c0_61 = arith.constant 0 : index
    %92 = vector.load %arg20[%c0_60, %c0_61] : memref<1x16xf32, #tpu.memory_space<vmem>>, vector<1x16xf32>
    %cst_62 = arith.constant dense<0.000000e+00> : vector<4xf32>
    %93 = vector.multi_reduction <add>, %90, %cst_62 [1] : vector<4x16xf32> to vector<4xf32>
    %94 = vector.shape_cast %93 : vector<4xf32> to vector<4x1xf32>
    %cst_63 = arith.constant 1.600000e+01 : f32
    %95 = vector.broadcast %cst_63 : f32 to vector<4x1xf32>
    %96 = arith.divf %94, %95 : vector<4x1xf32>
    %97 = vector.broadcast %96 : vector<4x1xf32> to vector<4x16xf32>
    %98 = arith.subf %90, %97 : vector<4x16xf32>
    %99 = arith.mulf %98, %98 : vector<4x16xf32>
    %cst_64 = arith.constant dense<0.000000e+00> : vector<4xf32>
    %100 = vector.multi_reduction <add>, %99, %cst_64 [1] : vector<4x16xf32> to vector<4xf32>
    %101 = vector.shape_cast %100 : vector<4xf32> to vector<4x1xf32>
    %cst_65 = arith.constant 1.600000e+01 : f32
    %102 = vector.broadcast %cst_65 : f32 to vector<4x1xf32>
    %103 = arith.divf %101, %102 : vector<4x1xf32>
    %104 = vector.broadcast %96 : vector<4x1xf32> to vector<4x16xf32>
    %105 = arith.subf %90, %104 : vector<4x16xf32>
    %cst_66 = arith.constant 9.99999974E-6 : f32
    %106 = vector.broadcast %cst_66 : f32 to vector<4x1xf32>
    %107 = arith.addf %103, %106 : vector<4x1xf32>
    %108 = math.rsqrt %107 : vector<4x1xf32>
    %109 = vector.broadcast %108 : vector<4x1xf32> to vector<4x16xf32>
    %110 = arith.mulf %105, %109 : vector<4x16xf32>
    %111 = vector.broadcast %91 : vector<1x16xf32> to vector<4x16xf32>
    %112 = arith.mulf %110, %111 : vector<4x16xf32>
    %113 = vector.broadcast %92 : vector<1x16xf32> to vector<4x16xf32>
    %114 = arith.addf %112, %113 : vector<4x16xf32>
    %c0_67 = arith.constant 0 : index
    %c0_68 = arith.constant 0 : index
    %115 = vector.load %arg21[%c0_67, %c0_68] : memref<16x4xf32, #tpu.memory_space<vmem>>, vector<16x4xf32>
    %cst_69 = arith.constant dense<0.000000e+00> : vector<4x4xf32>
    %116 = tpu.matmul %114, %115, %cst_69 {dimension_numbers = #tpu.dot_dimension_numbers<[1], [0], [0], [1], [0, 0, 1, 1], [], []>} : vector<4x16xf32>, vector<16x4xf32>, vector<4x4xf32> -> vector<4x4xf32>
    %c0_70 = arith.constant 0 : index
    %c0_71 = arith.constant 0 : index
    %117 = vector.load %arg22[%c0_70, %c0_71] : memref<1x4xf32, #tpu.memory_space<vmem>>, vector<1x4xf32>
    %118 = vector.broadcast %117 : vector<1x4xf32> to vector<4x4xf32>
    %119 = arith.addf %116, %118 : vector<4x4xf32>
    %c0_72 = arith.constant 0 : index
    %c0_73 = arith.constant 0 : index
    %120 = vector.load %arg24[%c0_72, %c0_73] : memref<4x4xf32, #tpu.memory_space<vmem>>, vector<4x4xf32>
    tpu.vector_store %arg24[%c0_72, %c0_73], %119 {strides = array<i32>} : memref<4x4xf32, #tpu.memory_space<vmem>>, vector<4x4xf32>,
    %cst_74 = arith.constant dense<0xFF800000> : vector<4xf32>
    %121 = vector.multi_reduction <maximumf>, %119, %cst_74 [1] : vector<4x4xf32> to vector<4xf32>
    %122 = vector.shape_cast %121 : vector<4xf32> to vector<4x1xf32>
    %123 = vector.broadcast %122 : vector<4x1xf32> to vector<4x4xf32>
    %124 = arith.subf %119, %123 : vector<4x4xf32>
    %125 = math.exp %124 : vector<4x4xf32>
    %cst_75 = arith.constant dense<0.000000e+00> : vector<4xf32>
    %126 = vector.multi_reduction <add>, %125, %cst_75 [1] : vector<4x4xf32> to vector<4xf32>
    %127 = vector.shape_cast %126 : vector<4xf32> to vector<4x1xf32>
    %128 = math.log %127 : vector<4x1xf32>
    %129 = arith.addf %128, %122 : vector<4x1xf32>
    %c0_76 = arith.constant 0 : index
    %c0_77 = arith.constant 0 : index
    %130 = vector.load %arg1[%c0_76, %c0_77] : memref<4x4xf32, #tpu.memory_space<vmem>>, vector<4x4xf32>
    %131 = arith.mulf %130, %119 : vector<4x4xf32>
    %cst_78 = arith.constant dense<0.000000e+00> : vector<4xf32>
    %132 = vector.multi_reduction <add>, %131, %cst_78 [1] : vector<4x4xf32> to vector<4xf32>
    %133 = vector.shape_cast %132 : vector<4xf32> to vector<4x1xf32>
    %134 = tpu.iota {dimensions = array<i32: 0>} : vector<4x1xi32>
    %c2_i32 = arith.constant 2 : i32
    %135 = vector.broadcast %c2_i32 : i32 to vector<4x1xi32>
    %136 = arith.cmpi slt, %134, %135 : vector<4x1xi32>
    %cst_79 = arith.constant 5.000000e-01 : f32
    %cst_80 = arith.constant 0.000000e+00 : f32
    %137 = vector.broadcast %cst_79 : f32 to vector<4x1xf32>
    %138 = vector.broadcast %cst_80 : f32 to vector<4x1xf32>
    %139 = arith.select %136, %137, %138 : vector<4x1xi1>, vector<4x1xf32>
    %140 = arith.subf %129, %133 : vector<4x1xf32>
    %141 = arith.mulf %139, %140 : vector<4x1xf32>
    %cst_81 = arith.constant dense<0.000000e+00> : vector<1xf32>
    %142 = vector.multi_reduction <add>, %141, %cst_81 [0] : vector<4x1xf32> to vector<1xf32>
    %143 = vector.shape_cast %142 : vector<1xf32> to vector<1x1xf32>
    %c0_82 = arith.constant 0 : index
    %c0_83 = arith.constant 0 : index
    %144 = vector.load %arg23[%c0_82, %c0_83] : memref<1x1xf32, #tpu.memory_space<vmem>>, vector<1x1xf32>
    tpu.vector_store %arg23[%c0_82, %c0_83], %143 {strides = array<i32>} : memref<1x1xf32, #tpu.memory_space<vmem>>, vector<1x1xf32>,
    return
  }
}

</mosaic_0001>

<llo_original>
// kernel: fwd.1
$region0: #{fwd.1}
  #allocation0 [shape = 'u32[]', space=smem, size = 0x4, offset = 0x4, fixed_abs, tag = 'smem constant byte address 0x4 - core index']
  #allocation1 [shape = 'u32[72,128]{1,0:T(1,128)}', space=vmem, size = 0x9000, scoped, tag = 'internal scratch']
  %s0 = inlined_call_operand.vmem [shape: f32[4,128], index: 0, kind: input, shape index: {}]
  %s1 = inlined_call_operand.vmem [shape: f32[4,4], index: 1, kind: input, shape index: {}]
  %s2 = inlined_call_operand.vmem [shape: f32[4,32], index: 2, kind: input, shape index: {}]
  %s3 = inlined_call_operand.hbm [shape: f32[128,256], index: 3, kind: input, shape index: {}]
  %s4 = inlined_call_operand.vmem [shape: f32[1,256], index: 4, kind: input, shape index: {}]
  %s5 = inlined_call_operand.vmem [shape: f32[256,256], index: 5, kind: input, shape index: {}]
  %s6 = inlined_call_operand.vmem [shape: f32[1,256], index: 6, kind: input, shape index: {}]
  %s7 = inlined_call_operand.vmem [shape: f32[1,256], index: 7, kind: input, shape index: {}]
  %s8 = inlined_call_operand.vmem [shape: f32[1,256], index: 8, kind: input, shape index: {}]
  %s9 = inlined_call_operand.vmem [shape: f32[256,32], index: 9, kind: input, shape index: {}]
  %s10 = inlined_call_operand.vmem [shape: f32[1,32], index: 10, kind: input, shape index: {}]
  %s11 = inlined_call_operand.vmem [shape: f32[256,32], index: 11, kind: input, shape index: {}]
  %s12 = inlined_call_operand.vmem [shape: f32[1,32], index: 12, kind: input, shape index: {}]
  %s13 = inlined_call_operand.hbm [shape: f32[32,512], index: 13, kind: input, shape index: {}]
  %s14 = inlined_call_operand.vmem [shape: f32[1,512], index: 14, kind: input, shape index: {}]
  %s15 = inlined_call_operand.hbm [shape: f32[512,128], index: 15, kind: input, shape index: {}]
  %s16 = inlined_call_operand.vmem [shape: f32[1,128], index: 16, kind: input, shape index: {}]
  %s17 = inlined_call_operand.vmem [shape: f32[32,16], index: 17, kind: input, shape index: {}]
  %s18 = inlined_call_operand.vmem [shape: f32[1,16], index: 18, kind: input, shape index: {}]
  %s19 = inlined_call_operand.vmem [shape: f32[1,16], index: 19, kind: input, shape index: {}]
  %s20 = inlined_call_operand.vmem [shape: f32[1,16], index: 20, kind: input, shape index: {}]
  %s21 = inlined_call_operand.vmem [shape: f32[16,4], index: 21, kind: input, shape index: {}]
  %s22 = inlined_call_operand.vmem [shape: f32[1,4], index: 22, kind: input, shape index: {}]
  %s23 = inlined_call_operand.hbm [shape: f32[1,1], index: 23, kind: output, shape index: {0}]
  %s24 = inlined_call_operand.hbm [shape: f32[4,4], index: 24, kind: output, shape index: {1}]
  %s25 = inlined_call_operand.hbm [shape: f32[4,128], index: 25, kind: output, shape index: {2}]
  %26 = xla_tuple %s23, %s24, %s25
  %s27 = sld [smem:[#allocation0]]
  $region130: #{fwd.1} parent=0
    _
  %s29 = ssub.s32 1, %s27
  %s30 = scalar_select 0, %s29, %s27
  $region1: #{fwd.1} parent=0
    #allocation2 [shape = 'u8[131072]{0}', space=vmem, size = 0x20000, scoped, tag = 'input window, operand 3, single buffered']
    #allocation3 [shape = 's32[1]{0}', space=sflag, size = 0x4, scoped, tag = 'scoped memory for fwd.1']
    #allocation4 [shape = 's32[1]{0}', space=sflag, size = 0x4, scoped, tag = 'scoped memory for fwd.1']
    #allocation5 [shape = 'u8[65536]{0}', space=vmem, size = 0x10000, scoped, tag = 'input window, operand 13, single buffered']
    #allocation6 [shape = 's32[1]{0}', space=sflag, size = 0x4, scoped, tag = 'scoped memory for fwd.1']
    #allocation7 [shape = 'u8[262144]{0}', space=vmem, size = 0x40000, scoped, tag = 'input window, operand 15, single buffered']
    #allocation8 [shape = 'u8[512]{0}', space=vmem, size = 0x400, scoped, tag = 'output window, operand 0, single buffered']
    #allocation9 [shape = 'u8[2048]{0}', space=vmem, size = 0x800, scoped, tag = 'output window, operand 1, single buffered']
    #allocation10 [shape = 's32[1]{0}', space=sflag, size = 0x4, scoped, tag = 'scoped memory for fwd.1']
    #allocation11 [shape = 'u8[2048]{0}', space=vmem, size = 0x800, scoped, tag = 'output window, operand 2, single buffered']
    %31 = vsyncpa [#allocation3], 0
    %32 = vsyncpa [#allocation6], 0
    %33 = vsyncpa [#allocation4], 0
    %34 = vsyncpa [#allocation10], 0
    // Predicated region
    $region2: #{fwd.1} parent=1 // pred_check
      _
    $region3: #{fwd.1} parent=1 // pred_check_branch
      %36 = sbr.rel (0) target = $region5
    $region4: #{fwd.1} parent=1 // pred_region
      _
    $region5: #{fwd.1} parent=1 // pred_fallthru
      _
    // Predicated region
    $region6: #{fwd.1} parent=1 // pred_check
      _
    $region7: #{fwd.1} parent=1 // pred_check_branch
      %38 = sbr.rel (0) target = $region9
    $region8: #{fwd.1} parent=1 // pred_region
      _
    $region9: #{fwd.1} parent=1 // pred_fallthru
      _
    // Predicated region
    $region10: #{fwd.1} parent=1 // pred_check
      _
    $region11: #{fwd.1} parent=1 // pred_check_branch
      %40 = sbr.rel (0) target = $region13
    $region12: #{fwd.1} parent=1 // pred_region
      _
    $region13: #{fwd.1} parent=1 // pred_fallthru
      _
    // Predicated region
    $region14: #{fwd.1} parent=1 // pred_check
      _
    $region15: #{fwd.1} parent=1 // pred_check_branch
      %42 = sbr.rel (0) target = $region17
    $region16: #{fwd.1} parent=1 // pred_region
      %44 = vsyncadd [#allocation3], 0
      %s45 = sshll.u32 %s3, 4
      %s46 = int_to_ptr.hbm [resolvable:$true] %s45
      %s47 = sshll.u32 [#allocation2], 4
      %s48 = int_to_ptr.vmem [resolvable:$true] %s47
      %53 = dma.hbm_to_vmem [thread:$0]  %s46, 4096, %s48, [#allocation3], 256, 256, 16
    $region17: #{fwd.1} parent=1 // pred_fallthru
      _
    // Predicated region
    $region18: #{fwd.1} parent=1 // pred_check
      _
    $region19: #{fwd.1} parent=1 // pred_check_branch
      %55 = sbr.rel (0) target = $region21
    $region20: #{fwd.1} parent=1 // pred_region
      _
    $region21: #{fwd.1} parent=1 // pred_fallthru
      _
    // Predicated region
    $region22: #{fwd.1} parent=1 // pred_check
      _
    $region23: #{fwd.1} parent=1 // pred_check_branch
      %57 = sbr.rel (0) target = $region25
    $region24: #{fwd.1} parent=1 // pred_region
      _
    $region25: #{fwd.1} parent=1 // pred_fallthru
      _
    // Predicated region
    $region26: #{fwd.1} parent=1 // pred_check
      _
    $region27: #{fwd.1} parent=1 // pred_check_branch
      %59 = sbr.rel (0) target = $region29
    $region28: #{fwd.1} parent=1 // pred_region
      _
    $region29: #{fwd.1} parent=1 // pred_fallthru
      _
    // Predicated region
    $region30: #{fwd.1} parent=1 // pred_check
      _
    $region31: #{fwd.1} parent=1 // pred_check_branch
      %61 = sbr.rel (0) target = $region33
    $region32: #{fwd.1} parent=1 // pred_region
      _
    $region33: #{fwd.1} parent=1 // pred_fallthru
      _
    // Predicated region
    $region34: #{fwd.1} parent=1 // pred_check
      _
    $region35: #{fwd.1} parent=1 // pred_check_branch
      %63 = sbr.rel (0) target = $region37
    $region36: #{fwd.1} parent=1 // pred_region
      _
    $region37: #{fwd.1} parent=1 // pred_fallthru
      _
    // Predicated region
    $region38: #{fwd.1} parent=1 // pred_check
      _
    $region39: #{fwd.1} parent=1 // pred_check_branch
      %65 = sbr.rel (0) target = $region41
    $region40: #{fwd.1} parent=1 // pred_region
      _
    $region41: #{fwd.1} parent=1 // pred_fallthru
      _
    // Predicated region
    $region42: #{fwd.1} parent=1 // pred_check
      _
    $region43: #{fwd.1} parent=1 // pred_check_branch
      %67 = sbr.rel (0) target = $region45
    $region44: #{fwd.1} parent=1 // pred_region
      _
    $region45: #{fwd.1} parent=1 // pred_fallthru
      _
    // Predicated region
    $region46: #{fwd.1} parent=1 // pred_check
      _
    $region47: #{fwd.1} parent=1 // pred_check_branch
      %69 = sbr.rel (0) target = $region49
    $region48: #{fwd.1} parent=1 // pred_region
      _
    $region49: #{fwd.1} parent=1 // pred_fallthru
      _
    // Predicated region
    $region50: #{fwd.1} parent=1 // pred_check
      _
    $region51: #{fwd.1} parent=1 // pred_check_branch
      %71 = sbr.rel (0) target = $region53
    $region52: #{fwd.1} parent=1 // pred_region
      _
    $region53: #{fwd.1} parent=1 // pred_fallthru
      _
    // Predicated region
    $region54: #{fwd.1} parent=1 // pred_check
      _
    $region55: #{fwd.1} parent=1 // pred_check_branch
      %73 = sbr.rel (0) target = $region57
    $region56: #{fwd.1} parent=1 // pred_region
      %75 = vsyncadd [#allocation6], 0
      %s76 = sshll.u32 %s13, 4
      %s77 = int_to_ptr.hbm [resolvable:$true] %s76
      %s78 = sshll.u32 [#allocation5], 4
      %s79 = int_to_ptr.vmem [resolvable:$true] %s78
      %84 = dma.hbm_to_vmem [thread:$0]  %s77, 2048, %s79, [#allocation6], 512, 512, 32
    $region57: #{fwd.1} parent=1 // pred_fallthru
      _
    // Predicated region
    $region58: #{fwd.1} parent=1 // pred_check
      _
    $region59: #{fwd.1} parent=1 // pred_check_branch
      %86 = sbr.rel (0) target = $region61
    $region60: #{fwd.1} parent=1 // pred_region
      _
    $region61: #{fwd.1} parent=1 // pred_fallthru
      _
    // Predicated region
    $region62: #{fwd.1} parent=1 // pred_check
      _
    $region63: #{fwd.1} parent=1 // pred_check_branch
      %88 = sbr.rel (0) target = $region65
    $region64: #{fwd.1} parent=1 // pred_region
      %90 = vsyncadd [#allocation6], 0
      %s91 = sshll.u32 %s15, 4
      %s92 = int_to_ptr.hbm [resolvable:$true] %s91
      %s93 = sshll.u32 [#allocation7], 4
      %s94 = int_to_ptr.vmem [resolvable:$true] %s93
      %99 = dma.hbm_to_vmem [thread:$0]  %s92, 8192, %s94, [#allocation6], 128, 128, 8
    $region65: #{fwd.1} parent=1 // pred_fallthru
      _
    // Predicated region
    $region66: #{fwd.1} parent=1 // pred_check
      _
    $region67: #{fwd.1} parent=1 // pred_check_branch
      %101 = sbr.rel (0) target = $region69
    $region68: #{fwd.1} parent=1 // pred_region
      _
    $region69: #{fwd.1} parent=1 // pred_fallthru
      _
    // Predicated region
    $region70: #{fwd.1} parent=1 // pred_check
      _
    $region71: #{fwd.1} parent=1 // pred_check_branch
      %103 = sbr.rel (0) target = $region73
    $region72: #{fwd.1} parent=1 // pred_region
      _
    $region73: #{fwd.1} parent=1 // pred_fallthru
      _
    // Predicated region
    $region74: #{fwd.1} parent=1 // pred_check
      _
    $region75: #{fwd.1} parent=1 // pred_check_branch
      %105 = sbr.rel (0) target = $region77
    $region76: #{fwd.1} parent=1 // pred_region
      _
    $region77: #{fwd.1} parent=1 // pred_fallthru
      _
    // Predicated region
    $region78: #{fwd.1} parent=1 // pred_check
      _
    $region79: #{fwd.1} parent=1 // pred_check_branch
      %107 = sbr.rel (0) target = $region81
    $region80: #{fwd.1} parent=1 // pred_region
      _
    $region81: #{fwd.1} parent=1 // pred_fallthru
      _
    // Predicated region
    $region82: #{fwd.1} parent=1 // pred_check
      _
    $region83: #{fwd.1} parent=1 // pred_check_branch
      %109 = sbr.rel (0) target = $region85
    $region84: #{fwd.1} parent=1 // pred_region
      _
    $region85: #{fwd.1} parent=1 // pred_fallthru
      _
    // Predicated region
    $region86: #{fwd.1} parent=1 // pred_check
      _
    $region87: #{fwd.1} parent=1 // pred_check_branch
      %111 = sbr.rel (0) target = $region89
    $region88: #{fwd.1} parent=1 // pred_region
      _
    $region89: #{fwd.1} parent=1 // pred_fallthru
      _
    // Predicated region
    $region90: #{fwd.1} parent=1 // pred_check
      _
    $region91: #{fwd.1} parent=1 // pred_check_branch
      %113 = sbr.rel (0) target = $region93
    $region92: #{fwd.1} parent=1 // pred_region
      _
    $region93: #{fwd.1} parent=1 // pred_fallthru
      _
    // Predicated region
    $region94: #{fwd.1} parent=1 // pred_check
      _
    $region95: #{fwd.1} parent=1 // pred_check_branch
      %115 = sbr.rel (0) target = $region97
    $region96: #{fwd.1} parent=1 // pred_region
      %117 = dma.done [#allocation3], 4096
    $region97: #{fwd.1} parent=1 // pred_fallthru
      _
    // Predicated region
    $region98: #{fwd.1} parent=1 // pred_check
      _
    $region99: #{fwd.1} parent=1 // pred_check_branch
      %119 = sbr.rel (0) target = $region101
    $region100: #{fwd.1} parent=1 // pred_region
      %121 = dma.done [#allocation6], 2048
    $region101: #{fwd.1} parent=1 // pred_fallthru
      _
    // Predicated region
    $region102: #{fwd.1} parent=1 // pred_check
      _
    $region103: #{fwd.1} parent=1 // pred_check_branch
      %123 = sbr.rel (0) target = $region105
    $region104: #{fwd.1} parent=1 // pred_region
      %125 = dma.done [#allocation6], 8192
    $region105: #{fwd.1} parent=1 // pred_fallthru
      _
    %v126 = vld [vmem:[%s0] sm:$0xf]
    %v127 = vld [vmem:[#allocation2] sm:$0xff]
    %v128 = vld [vmem:[#allocation2 + $0x8] sm:$0xff]
    %v129 = vld [vmem:[#allocation2 + $0x10] sm:$0xff]
    %v130 = vld [vmem:[#allocation2 + $0x18] sm:$0xff]
    %v131 = vld [vmem:[#allocation2 + $0x20] sm:$0xff]
    %v132 = vld [vmem:[#allocation2 + $0x28] sm:$0xff]
    %v133 = vld [vmem:[#allocation2 + $0x30] sm:$0xff]
    %v134 = vld [vmem:[#allocation2 + $0x38] sm:$0xff]
    %v135 = vld [vmem:[#allocation2 + $0x40] sm:$0xff]
    %v136 = vld [vmem:[#allocation2 + $0x48] sm:$0xff]
    %v137 = vld [vmem:[#allocation2 + $0x50] sm:$0xff]
    %v138 = vld [vmem:[#allocation2 + $0x58] sm:$0xff]
    %v139 = vld [vmem:[#allocation2 + $0x60] sm:$0xff]
    %v140 = vld [vmem:[#allocation2 + $0x68] sm:$0xff]
    %v141 = vld [vmem:[#allocation2 + $0x70] sm:$0xff]
    %v142 = vld [vmem:[#allocation2 + $0x78] sm:$0xff]
    %v143 = vld [vmem:[#allocation2 + $0x80] sm:$0xff]
    %v144 = vld [vmem:[#allocation2 + $0x88] sm:$0xff]
    %v145 = vld [vmem:[#allocation2 + $0x90] sm:$0xff]
    %v146 = vld [vmem:[#allocation2 + $0x98] sm:$0xff]
    %v147 = vld [vmem:[#allocation2 + $0xa0] sm:$0xff]
    %v148 = vld [vmem:[#allocation2 + $0xa8] sm:$0xff]
    %v149 = vld [vmem:[#allocation2 + $0xb0] sm:$0xff]
    %v150 = vld [vmem:[#allocation2 + $0xb8] sm:$0xff]
    %v151 = vld [vmem:[#allocation2 + $0xc0] sm:$0xff]
    %v152 = vld [vmem:[#allocation2 + $0xc8] sm:$0xff]
    %v153 = vld [vmem:[#allocation2 + $0xd0] sm:$0xff]
    %v154 = vld [vmem:[#allocation2 + $0xd8] sm:$0xff]
    %v155 = vld [vmem:[#allocation2 + $0xe0] sm:$0xff]
    %v156 = vld [vmem:[#allocation2 + $0xe8] sm:$0xff]
    %v157 = vld [vmem:[#allocation2 + $0xf0] sm:$0xff]
    %v158 = vld [vmem:[#allocation2 + $0xf8] sm:$0xff]
    %v159 = vld [vmem:[%s4] sm:$0x3]
    %v161 = vperm.slane %v159, 0
    %v162 = vperm.slane %v159, 1
    %165 = vmatpush.msra.mxu0 %v157
    %166 = vmatpush.msra.mxu0 %v155
    %167 = vmatpush.msra.mxu0 %v153
    %168 = vmatpush.msra.mxu0 %v151
    %169 = vmatpush.msra.mxu0 %v149
    %170 = vmatpush.msra.mxu0 %v147
    %171 = vmatpush.msra.mxu0 %v145
    %172 = vmatpush.msra.mxu0 %v143
    %173 = vmatpush.msra.mxu0 %v141
    %174 = vmatpush.msra.mxu0 %v139
    %175 = vmatpush.msra.mxu0 %v137
    %176 = vmatpush.msra.mxu0 %v135
    %177 = vmatpush.msra.mxu0 %v133
    %178 = vmatpush.msra.mxu0 %v131
    %179 = vmatpush.msra.mxu0 %v129
    %180 = vmatpush.msra.mxu0 %v127
    %181 = vmatmul.f32.gmra.mxu0 %v126
    %v182 = vpop.f32.mrf.mxu0
    %v183 = vadd.f32 %v161, %v182
    %184 = vdwg.mxu0
    %185 = vmatpush.msra.mxu0 %v158
    %186 = vmatpush.msra.mxu0 %v156
    %187 = vmatpush.msra.mxu0 %v154
    %188 = vmatpush.msra.mxu0 %v152
    %189 = vmatpush.msra.mxu0 %v150
    %190 = vmatpush.msra.mxu0 %v148
    %191 = vmatpush.msra.mxu0 %v146
    %192 = vmatpush.msra.mxu0 %v144
    %193 = vmatpush.msra.mxu0 %v142
    %194 = vmatpush.msra.mxu0 %v140
    %195 = vmatpush.msra.mxu0 %v138
    %196 = vmatpush.msra.mxu0 %v136
    %197 = vmatpush.msra.mxu0 %v134
    %198 = vmatpush.msra.mxu0 %v132
    %199 = vmatpush.msra.mxu0 %v130
    %200 = vmatpush.msra.mxu0 %v128
    %201 = vmatmul.f32.gmra.mxu0 %v126
    %v202 = vpop.f32.mrf.mxu0
    %v203 = vadd.f32 %v162, %v202
    %204 = vdwg.mxu0
    %v205 = vld [vmem:[%s5] sm:$0xff]
    %v206 = vld [vmem:[%s5 + $0x8] sm:$0xff]
    %v207 = vld [vmem:[%s5 + $0x10] sm:$0xff]
    %v208 = vld [vmem:[%s5 + $0x18] sm:$0xff]
    %v209 = vld [vmem:[%s5 + $0x20] sm:$0xff]
    %v210 = vld [vmem:[%s5 + $0x28] sm:$0xff]
    %v211 = vld [vmem:[%s5 + $0x30] sm:$0xff]
    %v212 = vld [vmem:[%s5 + $0x38] sm:$0xff]
    %v213 = vld [vmem:[%s5 + $0x40] sm:$0xff]
    %v214 = vld [vmem:[%s5 + $0x48] sm:$0xff]
    %v215 = vld [vmem:[%s5 + $0x50] sm:$0xff]
    %v216 = vld [vmem:[%s5 + $0x58] sm:$0xff]
    %v217 = vld [vmem:[%s5 + $0x60] sm:$0xff]
    %v218 = vld [vmem:[%s5 + $0x68] sm:$0xff]
    %v219 = vld [vmem:[%s5 + $0x70] sm:$0xff]
    %v220 = vld [vmem:[%s5 + $0x78] sm:$0xff]
    %v221 = vld [vmem:[%s5 + $0x80] sm:$0xff]
    %v222 = vld [vmem:[%s5 + $0x88] sm:$0xff]
    %v223 = vld [vmem:[%s5 + $0x90] sm:$0xff]
    %v224 = vld [vmem:[%s5 + $0x98] sm:$0xff]
    %v225 = vld [vmem:[%s5 + $0xa0] sm:$0xff]
    %v226 = vld [vmem:[%s5 + $0xa8] sm:$0xff]
    %v227 = vld [vmem:[%s5 + $0xb0] sm:$0xff]
    %v228 = vld [vmem:[%s5 + $0xb8] sm:$0xff]
    %v229 = vld [vmem:[%s5 + $0xc0] sm:$0xff]
    %v230 = vld [vmem:[%s5 + $0xc8] sm:$0xff]
    %v231 = vld [vmem:[%s5 + $0xd0] sm:$0xff]
    %v232 = vld [vmem:[%s5 + $0xd8] sm:$0xff]
    %v233 = vld [vmem:[%s5 + $0xe0] sm:$0xff]
    %v234 = vld [vmem:[%s5 + $0xe8] sm:$0xff]
    %v235 = vld [vmem:[%s5 + $0xf0] sm:$0xff]
    %v236 = vld [vmem:[%s5 + $0xf8] sm:$0xff]
    %v237 = vld [vmem:[%s5 + $0x100] sm:$0xff]
    %v238 = vld [vmem:[%s5 + $0x108] sm:$0xff]
    %v239 = vld [vmem:[%s5 + $0x110] sm:$0xff]
    %v240 = vld [vmem:[%s5 + $0x118] sm:$0xff]
    %v241 = vld [vmem:[%s5 + $0x120] sm:$0xff]
    %v242 = vld [vmem:[%s5 + $0x128] sm:$0xff]
    %v243 = vld [vmem:[%s5 + $0x130] sm:$0xff]
    %v244 = vld [vmem:[%s5 + $0x138] sm:$0xff]
    %v245 = vld [vmem:[%s5 + $0x140] sm:$0xff]
    %v246 = vld [vmem:[%s5 + $0x148] sm:$0xff]
    %v247 = vld [vmem:[%s5 + $0x150] sm:$0xff]
    %v248 = vld [vmem:[%s5 + $0x158] sm:$0xff]
    %v249 = vld [vmem:[%s5 + $0x160] sm:$0xff]
    %v250 = vld [vmem:[%s5 + $0x168] sm:$0xff]
    %v251 = vld [vmem:[%s5 + $0x170] sm:$0xff]
    %v252 = vld [vmem:[%s5 + $0x178] sm:$0xff]
    %v253 = vld [vmem:[%s5 + $0x180] sm:$0xff]
    %v254 = vld [vmem:[%s5 + $0x188] sm:$0xff]
    %v255 = vld [vmem:[%s5 + $0x190] sm:$0xff]
    %v256 = vld [vmem:[%s5 + $0x198] sm:$0xff]
    %v257 = vld [vmem:[%s5 + $0x1a0] sm:$0xff]
    %v258 = vld [vmem:[%s5 + $0x1a8] sm:$0xff]
    %v259 = vld [vmem:[%s5 + $0x1b0] sm:$0xff]
    %v260 = vld [vmem:[%s5 + $0x1b8] sm:$0xff]
    %v261 = vld [vmem:[%s5 + $0x1c0] sm:$0xff]
    %v262 = vld [vmem:[%s5 + $0x1c8] sm:$0xff]
    %v263 = vld [vmem:[%s5 + $0x1d0] sm:$0xff]
    %v264 = vld [vmem:[%s5 + $0x1d8] sm:$0xff]
    %v265 = vld [vmem:[%s5 + $0x1e0] sm:$0xff]
    %v266 = vld [vmem:[%s5 + $0x1e8] sm:$0xff]
    %v267 = vld [vmem:[%s5 + $0x1f0] sm:$0xff]
    %v268 = vld [vmem:[%s5 + $0x1f8] sm:$0xff]
    %v269 = vld [vmem:[%s6] sm:$0x3]
    %v271 = vperm.slane %v269, 0
    %v272 = vperm.slane %v269, 1
    %275 = vmatpush.msra.mxu0 %v235
    %276 = vmatpush.msra.mxu0 %v233
    %277 = vmatpush.msra.mxu0 %v231
    %278 = vmatpush.msra.mxu0 %v229
    %279 = vmatpush.msra.mxu0 %v227
    %280 = vmatpush.msra.mxu0 %v225
    %281 = vmatpush.msra.mxu0 %v223
    %282 = vmatpush.msra.mxu0 %v221
    %283 = vmatpush.msra.mxu0 %v219
    %284 = vmatpush.msra.mxu0 %v217
    %285 = vmatpush.msra.mxu0 %v215
    %286 = vmatpush.msra.mxu0 %v213
    %287 = vmatpush.msra.mxu0 %v211
    %288 = vmatpush.msra.mxu0 %v209
    %289 = vmatpush.msra.mxu0 %v207
    %290 = vmatpush.msra.mxu0 %v205
    %291 = vmatmul.f32.gmra.mxu0 %v183
    %v292 = vpop.f32.mrf.mxu0
    %v293 = vadd.f32 %v271, %v292
    %294 = vdwg.mxu0
    %295 = vmatpush.msra.mxu0 %v267
    %296 = vmatpush.msra.mxu0 %v265
    %297 = vmatpush.msra.mxu0 %v263
    %298 = vmatpush.msra.mxu0 %v261
    %299 = vmatpush.msra.mxu0 %v259
    %300 = vmatpush.msra.mxu0 %v257
    %301 = vmatpush.msra.mxu0 %v255
    %302 = vmatpush.msra.mxu0 %v253
    %303 = vmatpush.msra.mxu0 %v251
    %304 = vmatpush.msra.mxu0 %v249
    %305 = vmatpush.msra.mxu0 %v247
    %306 = vmatpush.msra.mxu0 %v245
    %307 = vmatpush.msra.mxu0 %v243
    %308 = vmatpush.msra.mxu0 %v241
    %309 = vmatpush.msra.mxu0 %v239
    %310 = vmatpush.msra.mxu0 %v237
    %311 = vmatmul.f32.gmra.mxu0 %v203
    %v312 = vpop.f32.mrf.mxu0
    %v313 = vadd.f32 %v293, %v312
    %314 = vdwg.mxu0
    %315 = vmatpush.msra.mxu0 %v236
    %316 = vmatpush.msra.mxu0 %v234
    %317 = vmatpush.msra.mxu0 %v232
    %318 = vmatpush.msra.mxu0 %v230
    %319 = vmatpush.msra.mxu0 %v228
    %320 = vmatpush.msra.mxu0 %v226
    %321 = vmatpush.msra.mxu0 %v224
    %322 = vmatpush.msra.mxu0 %v222
    %323 = vmatpush.msra.mxu0 %v220
    %324 = vmatpush.msra.mxu0 %v218
    %325 = vmatpush.msra.mxu0 %v216
    %326 = vmatpush.msra.mxu0 %v214
    %327 = vmatpush.msra.mxu0 %v212
    %328 = vmatpush.msra.mxu0 %v210
    %329 = vmatpush.msra.mxu0 %v208
    %330 = vmatpush.msra.mxu0 %v206
    %331 = vmatmul.f32.gmra.mxu0 %v183
    %v332 = vpop.f32.mrf.mxu0
    %v333 = vadd.f32 %v272, %v332
    %334 = vdwg.mxu0
    %335 = vmatpush.msra.mxu0 %v268
    %336 = vmatpush.msra.mxu0 %v266
    %337 = vmatpush.msra.mxu0 %v264
    %338 = vmatpush.msra.mxu0 %v262
    %339 = vmatpush.msra.mxu0 %v260
    %340 = vmatpush.msra.mxu0 %v258
    %341 = vmatpush.msra.mxu0 %v256
    %342 = vmatpush.msra.mxu0 %v254
    %343 = vmatpush.msra.mxu0 %v252
    %344 = vmatpush.msra.mxu0 %v250
    %345 = vmatpush.msra.mxu0 %v248
    %346 = vmatpush.msra.mxu0 %v246
    %347 = vmatpush.msra.mxu0 %v244
    %348 = vmatpush.msra.mxu0 %v242
    %349 = vmatpush.msra.mxu0 %v240
    %350 = vmatpush.msra.mxu0 %v238
    %351 = vmatmul.f32.gmra.mxu0 %v203
    %v352 = vpop.f32.mrf.mxu0
    %v353 = vadd.f32 %v333, %v352
    %354 = vdwg.mxu0
    %v355 = vmul.f32 %v313, 0.5
    %v356 = vmul.f32 %v353, 0.5
    %v357 = vmul.f32 %v313, 0.70710677
    %v358 = vmul.f32 %v353, 0.70710677
    %v359 = vmul.f32 %v357, %v357
    %v360 = vmin.f32 16.0, %v359
    %v361 = vmul.f32 %v360, 2.1237322e-06
    %v362 = vadd.f32 %v361, 0.00028619796
    %v363 = vmul.f32 %v360, %v362
    %v364 = vadd.f32 %v363, 0.0036580483
    %v365 = vmul.f32 %v360, %v364
    %v366 = vadd.f32 %v365, 0.05243302
    %v367 = vmul.f32 %v360, %v366
    %v368 = vadd.f32 %v367, 0.18741608
    %v369 = vmul.f32 %v360, %v368
    %v370 = vadd.f32 %v369, 1.1283791
    %v371 = vmul.f32 %v357, %v370
    %v372 = vmul.f32 %v360, 3.8918573e-05
    %v373 = vadd.f32 %v372, 0.001143296
    %v374 = vmul.f32 %v360, %v373
    %v375 = vadd.f32 %v374, 0.014752088
    %v376 = vmul.f32 %v360, %v375
    %v377 = vadd.f32 %v376, 0.112945676
    %v378 = vmul.f32 %v360, %v377
    %v379 = vadd.f32 %v378, 0.4994258
    %v380 = vmul.f32 %v360, %v379
    %v381 = vadd.f32 %v380, 1.0
    %v382 = vrcp.pop %v381
    %v383 = vmul.f32 %v381, %v382
    %v384 = vsub.f32 1.0, %v383
    %v385 = vmul.f32 %v382, %v384
    %v386 = vadd.f32 %v382, %v385
    %vm387 = vweird.f32 %v381
    %vm388 = vweird.f32 %v382
    %vm389 = vmor %vm387, %vm388
    %v390 = vsel %vm389, %v382, %v386
    %v391 = vand.u32 2147483647, %v381
    %vm392 = vcmp.eq.f32.partialorder %v391, 8.507059e+37
    %v393 = vand.u32 %v381, 2147483648
    %v394 = vor.u32 1.1754944e-38, %v393
    %v395 = vsel %vm392, %v394, %v390
    %v396 = vmul.f32 %v371, %v395
    %v397 = vmin.f32 %v396, 1.0
    %v398 = vmax.f32 %v397, -1.0
    %v399 = vmul.f32 %v358, %v358
    %v400 = vmin.f32 16.0, %v399
    %v401 = vmul.f32 %v400, 2.1237322e-06
    %v402 = vadd.f32 %v401, 0.00028619796
    %v403 = vmul.f32 %v400, %v402
    %v404 = vadd.f32 %v403, 0.0036580483
    %v405 = vmul.f32 %v400, %v404
    %v406 = vadd.f32 %v405, 0.05243302
    %v407 = vmul.f32 %v400, %v406
    %v408 = vadd.f32 %v407, 0.18741608
    %v409 = vmul.f32 %v400, %v408
    %v410 = vadd.f32 %v409, 1.1283791
    %v411 = vmul.f32 %v358, %v410
    %v412 = vmul.f32 %v400, 3.8918573e-05
    %v413 = vadd.f32 %v412, 0.001143296
    %v414 = vmul.f32 %v400, %v413
    %v415 = vadd.f32 %v414, 0.014752088
    %v416 = vmul.f32 %v400, %v415
    %v417 = vadd.f32 %v416, 0.112945676
    %v418 = vmul.f32 %v400, %v417
    %v419 = vadd.f32 %v418, 0.4994258
    %v420 = vmul.f32 %v400, %v419
    %v421 = vadd.f32 %v420, 1.0
    %v422 = vrcp.pop %v421
    %v423 = vmul.f32 %v421, %v422
    %v424 = vsub.f32 1.0, %v423
    %v425 = vmul.f32 %v422, %v424
    %v426 = vadd.f32 %v422, %v425
    %vm427 = vweird.f32 %v421
    %vm428 = vweird.f32 %v422
    %vm429 = vmor %vm427, %vm428
    %v430 = vsel %vm429, %v422, %v426
    %v431 = vand.u32 2147483647, %v421
    %vm432 = vcmp.eq.f32.partialorder %v431, 8.507059e+37
    %v433 = vand.u32 %v421, 2147483648
    %v434 = vor.u32 1.1754944e-38, %v433
    %v435 = vsel %vm432, %v434, %v430
    %v436 = vmul.f32 %v411, %v435
    %v437 = vmin.f32 %v436, 1.0
    %v438 = vmax.f32 %v437, -1.0
    %v439 = vadd.f32 %v398, 1.0
    %v440 = vadd.f32 %v438, 1.0
    %v441 = vmul.f32 %v355, %v439
    %v442 = vmul.f32 %v356, %v440
    %v443 = vld [vmem:[%s7] sm:$0x3]
    %v444 = vld [vmem:[%s8] sm:$0x3]
    %vm445 = vcmask 1043456
    %v446 = vsel %vm445, %v441, 0.0
    %v447 = vsel %vm445, %v442, 0.0
    %v448 = vadd.f32 %v446, %v447
    %449 = vadd.xlane.f32.xlu0 %v448
    %v450 = vpop.xlane.xlu0 %449
    %v451 = vrcp.pop 256.0
    %v452 = vmul.f32 256.0, %v451
    %v453 = vsub.f32 1.0, %v452
    %v454 = vmul.f32 %v451, %v453
    %v455 = vadd.f32 %v451, %v454
    %vm456 = vweird.f32 %v451
    %v457 = vsel %vm456, %v451, %v455
    %v458 = vmul.f32 %v450, %v457
    %v459 = vsub.f32 %v441, %v458
    %v460 = vsub.f32 %v442, %v458
    %v461 = vmul.f32 %v459, %v459
    %v462 = vmul.f32 %v460, %v460
    %v463 = vsel %vm445, %v461, 0.0
    %v464 = vsel %vm445, %v462, 0.0
    %v465 = vadd.f32 %v463, %v464
    %466 = vadd.xlane.f32.xlu0 %v465
    %v467 = vpop.xlane.xlu0 %466
    %v468 = vmul.f32 %v467, %v457
    %v469 = vadd.f32 %v468, 1e-05
    %v470 = vrsqrt.pop %v469
    %v471 = vmul.f32 %v470, %v469
    %v472 = vmul.f32 %v471, %v470
    %v473 = vmul.f32 0.5, %v472
    %v474 = vsub.f32 1.5, %v473
    %v475 = vmul.f32 %v470, %v474
    %vm476 = vweird.f32 %v469
    %vm477 = vweird.f32 %v470
    %vm478 = vmor %vm476, %vm477
    %v479 = vsel %vm478, %v470, %v475
    %v480 = vmul.f32 %v459, %v479
    %v481 = vmul.f32 %v460, %v479
    %v483 = vperm.slane %v443, 0
    %v484 = vperm.slane %v443, 1
    %v487 = vmul.f32 %v480, %v483
    %v488 = vmul.f32 %v481, %v484
    %v490 = vperm.slane %v444, 0
    %v491 = vperm.slane %v444, 1
    %v494 = vadd.f32 %v487, %v490
    %v495 = vadd.f32 %v488, %v491
    %v496 = vld [vmem:[%s9] sm:$0xff]
    %v497 = vld [vmem:[%s9 + $0x8] sm:$0xff]
    %v498 = vld [vmem:[%s9 + $0x10] sm:$0xff]
    %v499 = vld [vmem:[%s9 + $0x18] sm:$0xff]
    %v500 = vld [vmem:[%s9 + $0x20] sm:$0xff]
    %v501 = vld [vmem:[%s9 + $0x28] sm:$0xff]
    %v502 = vld [vmem:[%s9 + $0x30] sm:$0xff]
    %v503 = vld [vmem:[%s9 + $0x38] sm:$0xff]
    %v504 = vld [vmem:[%s9 + $0x40] sm:$0xff]
    %v505 = vld [vmem:[%s9 + $0x48] sm:$0xff]
    %v506 = vld [vmem:[%s9 + $0x50] sm:$0xff]
    %v507 = vld [vmem:[%s9 + $0x58] sm:$0xff]
    %v508 = vld [vmem:[%s9 + $0x60] sm:$0xff]
    %v509 = vld [vmem:[%s9 + $0x68] sm:$0xff]
    %v510 = vld [vmem:[%s9 + $0x70] sm:$0xff]
    %v511 = vld [vmem:[%s9 + $0x78] sm:$0xff]
    %v512 = vld [vmem:[%s9 + $0x80] sm:$0xff]
    %v513 = vld [vmem:[%s9 + $0x88] sm:$0xff]
    %v514 = vld [vmem:[%s9 + $0x90] sm:$0xff]
    %v515 = vld [vmem:[%s9 + $0x98] sm:$0xff]
    %v516 = vld [vmem:[%s9 + $0xa0] sm:$0xff]
    %v517 = vld [vmem:[%s9 + $0xa8] sm:$0xff]
    %v518 = vld [vmem:[%s9 + $0xb0] sm:$0xff]
    %v519 = vld [vmem:[%s9 + $0xb8] sm:$0xff]
    %v520 = vld [vmem:[%s9 + $0xc0] sm:$0xff]
    %v521 = vld [vmem:[%s9 + $0xc8] sm:$0xff]
    %v522 = vld [vmem:[%s9 + $0xd0] sm:$0xff]
    %v523 = vld [vmem:[%s9 + $0xd8] sm:$0xff]
    %v524 = vld [vmem:[%s9 + $0xe0] sm:$0xff]
    %v525 = vld [vmem:[%s9 + $0xe8] sm:$0xff]
    %v526 = vld [vmem:[%s9 + $0xf0] sm:$0xff]
    %v527 = vld [vmem:[%s9 + $0xf8] sm:$0xff]
    %v528 = vld [vmem:[%s10] sm:$0x1]
    %v530 = vperm.slane %v528, 0
    %532 = vmatpush.msra.mxu0 %v511
    %533 = vmatpush.msra.mxu0 %v510
    %534 = vmatpush.msra.mxu0 %v509
    %535 = vmatpush.msra.mxu0 %v508
    %536 = vmatpush.msra.mxu0 %v507
    %537 = vmatpush.msra.mxu0 %v506
    %538 = vmatpush.msra.mxu0 %v505
    %539 = vmatpush.msra.mxu0 %v504
    %540 = vmatpush.msra.mxu0 %v503
    %541 = vmatpush.msra.mxu0 %v502
    %542 = vmatpush.msra.mxu0 %v501
    %543 = vmatpush.msra.mxu0 %v500
    %544 = vmatpush.msra.mxu0 %v499
    %545 = vmatpush.msra.mxu0 %v498
    %546 = vmatpush.msra.mxu0 %v497
    %547 = vmatpush.msra.mxu0 %v496
    %548 = vmatmul.f32.gmra.mxu0 %v494
    %v549 = vpop.f32.mrf.mxu0
    %v550 = vadd.f32 %v530, %v549
    %551 = vdwg.mxu0
    %552 = vmatpush.msra.mxu0 %v527
    %553 = vmatpush.msra.mxu0 %v526
    %554 = vmatpush.msra.mxu0 %v525
    %555 = vmatpush.msra.mxu0 %v524
    %556 = vmatpush.msra.mxu0 %v523
    %557 = vmatpush.msra.mxu0 %v522
    %558 = vmatpush.msra.mxu0 %v521
    %559 = vmatpush.msra.mxu0 %v520
    %560 = vmatpush.msra.mxu0 %v519
    %561 = vmatpush.msra.mxu0 %v518
    %562 = vmatpush.msra.mxu0 %v517
    %563 = vmatpush.msra.mxu0 %v516
    %564 = vmatpush.msra.mxu0 %v515
    %565 = vmatpush.msra.mxu0 %v514
    %566 = vmatpush.msra.mxu0 %v513
    %567 = vmatpush.msra.mxu0 %v512
    %568 = vmatmul.f32.gmra.mxu0 %v495
    %v569 = vpop.f32.mrf.mxu0
    %v570 = vadd.f32 %v550, %v569
    %571 = vdwg.mxu0
    %v572 = vld [vmem:[%s11] sm:$0xff]
    %v573 = vld [vmem:[%s11 + $0x8] sm:$0xff]
    %v574 = vld [vmem:[%s11 + $0x10] sm:$0xff]
    %v575 = vld [vmem:[%s11 + $0x18] sm:$0xff]
    %v576 = vld [vmem:[%s11 + $0x20] sm:$0xff]
    %v577 = vld [vmem:[%s11 + $0x28] sm:$0xff]
    %v578 = vld [vmem:[%s11 + $0x30] sm:$0xff]
    %v579 = vld [vmem:[%s11 + $0x38] sm:$0xff]
    %v580 = vld [vmem:[%s11 + $0x40] sm:$0xff]
    %v581 = vld [vmem:[%s11 + $0x48] sm:$0xff]
    %v582 = vld [vmem:[%s11 + $0x50] sm:$0xff]
    %v583 = vld [vmem:[%s11 + $0x58] sm:$0xff]
    %v584 = vld [vmem:[%s11 + $0x60] sm:$0xff]
    %v585 = vld [vmem:[%s11 + $0x68] sm:$0xff]
    %v586 = vld [vmem:[%s11 + $0x70] sm:$0xff]
    %v587 = vld [vmem:[%s11 + $0x78] sm:$0xff]
    %v588 = vld [vmem:[%s11 + $0x80] sm:$0xff]
    %v589 = vld [vmem:[%s11 + $0x88] sm:$0xff]
    %v590 = vld [vmem:[%s11 + $0x90] sm:$0xff]
    %v591 = vld [vmem:[%s11 + $0x98] sm:$0xff]
    %v592 = vld [vmem:[%s11 + $0xa0] sm:$0xff]
    %v593 = vld [vmem:[%s11 + $0xa8] sm:$0xff]
    %v594 = vld [vmem:[%s11 + $0xb0] sm:$0xff]
    %v595 = vld [vmem:[%s11 + $0xb8] sm:$0xff]
    %v596 = vld [vmem:[%s11 + $0xc0] sm:$0xff]
    %v597 = vld [vmem:[%s11 + $0xc8] sm:$0xff]
    %v598 = vld [vmem:[%s11 + $0xd0] sm:$0xff]
    %v599 = vld [vmem:[%s11 + $0xd8] sm:$0xff]
    %v600 = vld [vmem:[%s11 + $0xe0] sm:$0xff]
    %v601 = vld [vmem:[%s11 + $0xe8] sm:$0xff]
    %v602 = vld [vmem:[%s11 + $0xf0] sm:$0xff]
    %v603 = vld [vmem:[%s11 + $0xf8] sm:$0xff]
    %v604 = vld [vmem:[%s12] sm:$0x1]
    %v606 = vperm.slane %v604, 0
    %608 = vmatpush.msra.mxu0 %v587
    %609 = vmatpush.msra.mxu0 %v586
    %610 = vmatpush.msra.mxu0 %v585
    %611 = vmatpush.msra.mxu0 %v584
    %612 = vmatpush.msra.mxu0 %v583
    %613 = vmatpush.msra.mxu0 %v582
    %614 = vmatpush.msra.mxu0 %v581
    %615 = vmatpush.msra.mxu0 %v580
    %616 = vmatpush.msra.mxu0 %v579
    %617 = vmatpush.msra.mxu0 %v578
    %618 = vmatpush.msra.mxu0 %v577
    %619 = vmatpush.msra.mxu0 %v576
    %620 = vmatpush.msra.mxu0 %v575
    %621 = vmatpush.msra.mxu0 %v574
    %622 = vmatpush.msra.mxu0 %v573
    %623 = vmatpush.msra.mxu0 %v572
    %624 = vmatmul.f32.gmra.mxu0 %v494
    %v625 = vpop.f32.mrf.mxu0
    %v626 = vadd.f32 %v606, %v625
    %627 = vdwg.mxu0
    %628 = vmatpush.msra.mxu0 %v603
    %629 = vmatpush.msra.mxu0 %v602
    %630 = vmatpush.msra.mxu0 %v601
    %631 = vmatpush.msra.mxu0 %v600
    %632 = vmatpush.msra.mxu0 %v599
    %633 = vmatpush.msra.mxu0 %v598
    %634 = vmatpush.msra.mxu0 %v597
    %635 = vmatpush.msra.mxu0 %v596
    %636 = vmatpush.msra.mxu0 %v595
    %637 = vmatpush.msra.mxu0 %v594
    %638 = vmatpush.msra.mxu0 %v593
    %639 = vmatpush.msra.mxu0 %v592
    %640 = vmatpush.msra.mxu0 %v591
    %641 = vmatpush.msra.mxu0 %v590
    %642 = vmatpush.msra.mxu0 %v589
    %643 = vmatpush.msra.mxu0 %v588
    %644 = vmatmul.f32.gmra.mxu0 %v495
    %v645 = vpop.f32.mrf.mxu0
    %v646 = vadd.f32 %v626, %v645
    %647 = vdwg.mxu0
    %v648 = vmul.f32 %v646, 0.5
    %v649 = vmul.f32 %v648, 1.442695
    %v650 = vpow.pop %v649
    %v651 = vld [vmem:[%s2] sm:$0xf]
    %v652 = vmul.f32 %v650, %v651
    %v653 = vadd.f32 %v570, %v652
    %v654 = vld [vmem:[#allocation5] sm:$0xff]
    %v655 = vld [vmem:[#allocation5 + $0x8] sm:$0xff]
    %v656 = vld [vmem:[#allocation5 + $0x10] sm:$0xff]
    %v657 = vld [vmem:[#allocation5 + $0x18] sm:$0xff]
    %v658 = vld [vmem:[#allocation5 + $0x20] sm:$0xff]
    %v659 = vld [vmem:[#allocation5 + $0x28] sm:$0xff]
    %v660 = vld [vmem:[#allocation5 + $0x30] sm:$0xff]
    %v661 = vld [vmem:[#allocation5 + $0x38] sm:$0xff]
    %v662 = vld [vmem:[#allocation5 + $0x40] sm:$0xff]
    %v663 = vld [vmem:[#allocation5 + $0x48] sm:$0xff]
    %v664 = vld [vmem:[#allocation5 + $0x50] sm:$0xff]
    %v665 = vld [vmem:[#allocation5 + $0x58] sm:$0xff]
    %v666 = vld [vmem:[#allocation5 + $0x60] sm:$0xff]
    %v667 = vld [vmem:[#allocation5 + $0x68] sm:$0xff]
    %v668 = vld [vmem:[#allocation5 + $0x70] sm:$0xff]
    %v669 = vld [vmem:[#allocation5 + $0x78] sm:$0xff]
    %v670 = vld [vmem:[%s14] sm:$0xf]
    %v672 = vperm.slane %v670, 0
    %v673 = vperm.slane %v670, 1
    %v674 = vperm.slane %v670, 2
    %v675 = vperm.slane %v670, 3
    %vm680 = vcmask 261120
    %v682 = vsel %vm680, %v653, 0
    %684 = vmatpush.msra.mxu0 0.0
    %685 = vmatpush.msra.mxu0 0.0
    %686 = vmatpush.msra.mxu0 0.0
    %687 = vmatpush.msra.mxu0 0.0
    %688 = vmatpush.msra.mxu0 0.0
    %689 = vmatpush.msra.mxu0 0.0
    %690 = vmatpush.msra.mxu0 0.0
    %691 = vmatpush.msra.mxu0 0.0
    %692 = vmatpush.msra.mxu0 0.0
    %693 = vmatpush.msra.mxu0 0.0
    %694 = vmatpush.msra.mxu0 0.0
    %695 = vmatpush.msra.mxu0 0.0
    %696 = vmatpush.msra.mxu0 %v666
    %697 = vmatpush.msra.mxu0 %v662
    %698 = vmatpush.msra.mxu0 %v658
    %699 = vmatpush.msra.mxu0 %v654
    %700 = vmatmul.f32.gmra.mxu0 %v682
    %v701 = vpop.f32.mrf.mxu0
    %v702 = vadd.f32 %v672, %v701
    %703 = vdwg.mxu0
    %704 = vmatpush.msra.mxu0 0.0
    %705 = vmatpush.msra.mxu0 0.0
    %706 = vmatpush.msra.mxu0 0.0
    %707 = vmatpush.msra.mxu0 0.0
    %708 = vmatpush.msra.mxu0 0.0
    %709 = vmatpush.msra.mxu0 0.0
    %710 = vmatpush.msra.mxu0 0.0
    %711 = vmatpush.msra.mxu0 0.0
    %712 = vmatpush.msra.mxu0 0.0
    %713 = vmatpush.msra.mxu0 0.0
    %714 = vmatpush.msra.mxu0 0.0
    %715 = vmatpush.msra.mxu0 0.0
    %716 = vmatpush.msra.mxu0 %v667
    %717 = vmatpush.msra.mxu0 %v663
    %718 = vmatpush.msra.mxu0 %v659
    %719 = vmatpush.msra.mxu0 %v655
    %720 = vmatmul.f32.gmra.mxu0 %v682
    %v721 = vpop.f32.mrf.mxu0
    %v722 = vadd.f32 %v673, %v721
    %723 = vdwg.mxu0
    %724 = vmatpush.msra.mxu0 0.0
    %725 = vmatpush.msra.mxu0 0.0
    %726 = vmatpush.msra.mxu0 0.0
    %727 = vmatpush.msra.mxu0 0.0
    %728 = vmatpush.msra.mxu0 0.0
    %729 = vmatpush.msra.mxu0 0.0
    %730 = vmatpush.msra.mxu0 0.0
    %731 = vmatpush.msra.mxu0 0.0
    %732 = vmatpush.msra.mxu0 0.0
    %733 = vmatpush.msra.mxu0 0.0
    %734 = vmatpush.msra.mxu0 0.0
    %735 = vmatpush.msra.mxu0 0.0
    %736 = vmatpush.msra.mxu0 %v668
    %737 = vmatpush.msra.mxu0 %v664
    %738 = vmatpush.msra.mxu0 %v660
    %739 = vmatpush.msra.mxu0 %v656
    %740 = vmatmul.f32.gmra.mxu0 %v682
    %v741 = vpop.f32.mrf.mxu0
    %v742 = vadd.f32 %v674, %v741
    %743 = vdwg.mxu0
    %744 = vmatpush.msra.mxu0 0.0
    %745 = vmatpush.msra.mxu0 0.0
    %746 = vmatpush.msra.mxu0 0.0
    %747 = vmatpush.msra.mxu0 0.0
    %748 = vmatpush.msra.mxu0 0.0
    %749 = vmatpush.msra.mxu0 0.0
    %750 = vmatpush.msra.mxu0 0.0
    %751 = vmatpush.msra.mxu0 0.0
    %752 = vmatpush.msra.mxu0 0.0
    %753 = vmatpush.msra.mxu0 0.0
    %754 = vmatpush.msra.mxu0 0.0
    %755 = vmatpush.msra.mxu0 0.0
    %756 = vmatpush.msra.mxu0 %v669
    %757 = vmatpush.msra.mxu0 %v665
    %758 = vmatpush.msra.mxu0 %v661
    %759 = vmatpush.msra.mxu0 %v657
    %760 = vmatmul.f32.gmra.mxu0 %v682
    %v761 = vpop.f32.mrf.mxu0
    %v762 = vadd.f32 %v675, %v761
    %763 = vdwg.mxu0
    %v764 = vmul.f32 %v702, 0.5
    %v765 = vmul.f32 %v722, 0.5
    %v766 = vmul.f32 %v742, 0.5
    %v767 = vmul.f32 %v762, 0.5
    %v768 = vmul.f32 %v702, 0.70710677
    %v769 = vmul.f32 %v722, 0.70710677
    %v770 = vmul.f32 %v742, 0.70710677
    %v771 = vmul.f32 %v762, 0.70710677
    %v772 = vmul.f32 %v768, %v768
    %v773 = vmin.f32 16.0, %v772
    %v774 = vmul.f32 %v773, 2.1237322e-06
    %v775 = vadd.f32 %v774, 0.00028619796
    %v776 = vmul.f32 %v773, %v775
    %v777 = vadd.f32 %v776, 0.0036580483
    %v778 = vmul.f32 %v773, %v777
    %v779 = vadd.f32 %v778, 0.05243302
    %v780 = vmul.f32 %v773, %v779
    %v781 = vadd.f32 %v780, 0.18741608
    %v782 = vmul.f32 %v773, %v781
    %v783 = vadd.f32 %v782, 1.1283791
    %v784 = vmul.f32 %v768, %v783
    %v785 = vmul.f32 %v773, 3.8918573e-05
    %v786 = vadd.f32 %v785, 0.001143296
    %v787 = vmul.f32 %v773, %v786
    %v788 = vadd.f32 %v787, 0.014752088
    %v789 = vmul.f32 %v773, %v788
    %v790 = vadd.f32 %v789, 0.112945676
    %v791 = vmul.f32 %v773, %v790
    %v792 = vadd.f32 %v791, 0.4994258
    %v793 = vmul.f32 %v773, %v792
    %v794 = vadd.f32 %v793, 1.0
    %v795 = vrcp.pop %v794
    %v796 = vmul.f32 %v794, %v795
    %v797 = vsub.f32 1.0, %v796
    %v798 = vmul.f32 %v795, %v797
    %v799 = vadd.f32 %v795, %v798
    %vm800 = vweird.f32 %v794
    %vm801 = vweird.f32 %v795
    %vm802 = vmor %vm800, %vm801
    %v803 = vsel %vm802, %v795, %v799
    %v804 = vand.u32 2147483647, %v794
    %vm805 = vcmp.eq.f32.partialorder %v804, 8.507059e+37
    %v806 = vand.u32 %v794, 2147483648
    %v807 = vor.u32 1.1754944e-38, %v806
    %v808 = vsel %vm805, %v807, %v803
    %v809 = vmul.f32 %v784, %v808
    %v810 = vmin.f32 %v809, 1.0
    %v811 = vmax.f32 %v810, -1.0
    %v812 = vmul.f32 %v769, %v769
    %v813 = vmin.f32 16.0, %v812
    %v814 = vmul.f32 %v813, 2.1237322e-06
    %v815 = vadd.f32 %v814, 0.00028619796
    %v816 = vmul.f32 %v813, %v815
    %v817 = vadd.f32 %v816, 0.0036580483
    %v818 = vmul.f32 %v813, %v817
    %v819 = vadd.f32 %v818, 0.05243302
    %v820 = vmul.f32 %v813, %v819
    %v821 = vadd.f32 %v820, 0.18741608
    %v822 = vmul.f32 %v813, %v821
    %v823 = vadd.f32 %v822, 1.1283791
    %v824 = vmul.f32 %v769, %v823
    %v825 = vmul.f32 %v813, 3.8918573e-05
    %v826 = vadd.f32 %v825, 0.001143296
    %v827 = vmul.f32 %v813, %v826
    %v828 = vadd.f32 %v827, 0.014752088
    %v829 = vmul.f32 %v813, %v828
    %v830 = vadd.f32 %v829, 0.112945676
    %v831 = vmul.f32 %v813, %v830
    %v832 = vadd.f32 %v831, 0.4994258
    %v833 = vmul.f32 %v813, %v832
    %v834 = vadd.f32 %v833, 1.0
    %v835 = vrcp.pop %v834
    %v836 = vmul.f32 %v834, %v835
    %v837 = vsub.f32 1.0, %v836
    %v838 = vmul.f32 %v835, %v837
    %v839 = vadd.f32 %v835, %v838
    %vm840 = vweird.f32 %v834
    %vm841 = vweird.f32 %v835
    %vm842 = vmor %vm840, %vm841
    %v843 = vsel %vm842, %v835, %v839
    %v844 = vand.u32 2147483647, %v834
    %vm845 = vcmp.eq.f32.partialorder %v844, 8.507059e+37
    %v846 = vand.u32 %v834, 2147483648
    %v847 = vor.u32 1.1754944e-38, %v846
    %v848 = vsel %vm845, %v847, %v843
    %v849 = vmul.f32 %v824, %v848
    %v850 = vmin.f32 %v849, 1.0
    %v851 = vmax.f32 %v850, -1.0
    %v852 = vmul.f32 %v770, %v770
    %v853 = vmin.f32 16.0, %v852
    %v854 = vmul.f32 %v853, 2.1237322e-06
    %v855 = vadd.f32 %v854, 0.00028619796
    %v856 = vmul.f32 %v853, %v855
    %v857 = vadd.f32 %v856, 0.0036580483
    %v858 = vmul.f32 %v853, %v857
    %v859 = vadd.f32 %v858, 0.05243302
    %v860 = vmul.f32 %v853, %v859
    %v861 = vadd.f32 %v860, 0.18741608
    %v862 = vmul.f32 %v853, %v861
    %v863 = vadd.f32 %v862, 1.1283791
    %v864 = vmul.f32 %v770, %v863
    %v865 = vmul.f32 %v853, 3.8918573e-05
    %v866 = vadd.f32 %v865, 0.001143296
    %v867 = vmul.f32 %v853, %v866
    %v868 = vadd.f32 %v867, 0.014752088
    %v869 = vmul.f32 %v853, %v868
    %v870 = vadd.f32 %v869, 0.112945676
    %v871 = vmul.f32 %v853, %v870
    %v872 = vadd.f32 %v871, 0.4994258
    %v873 = vmul.f32 %v853, %v872
    %v874 = vadd.f32 %v873, 1.0
    %v875 = vrcp.pop %v874
    %v876 = vmul.f32 %v874, %v875
    %v877 = vsub.f32 1.0, %v876
    %v878 = vmul.f32 %v875, %v877
    %v879 = vadd.f32 %v875, %v878
    %vm880 = vweird.f32 %v874
    %vm881 = vweird.f32 %v875
    %vm882 = vmor %vm880, %vm881
    %v883 = vsel %vm882, %v875, %v879
    %v884 = vand.u32 2147483647, %v874
    %vm885 = vcmp.eq.f32.partialorder %v884, 8.507059e+37
    %v886 = vand.u32 %v874, 2147483648
    %v887 = vor.u32 1.1754944e-38, %v886
    %v888 = vsel %vm885, %v887, %v883
    %v889 = vmul.f32 %v864, %v888
    %v890 = vmin.f32 %v889, 1.0
    %v891 = vmax.f32 %v890, -1.0
    %v892 = vmul.f32 %v771, %v771
    %v893 = vmin.f32 16.0, %v892
    %v894 = vmul.f32 %v893, 2.1237322e-06
    %v895 = vadd.f32 %v894, 0.00028619796
    %v896 = vmul.f32 %v893, %v895
    %v897 = vadd.f32 %v896, 0.0036580483
    %v898 = vmul.f32 %v893, %v897
    %v899 = vadd.f32 %v898, 0.05243302
    %v900 = vmul.f32 %v893, %v899
    %v901 = vadd.f32 %v900, 0.18741608
    %v902 = vmul.f32 %v893, %v901
    %v903 = vadd.f32 %v902, 1.1283791
    %v904 = vmul.f32 %v771, %v903
    %v905 = vmul.f32 %v893, 3.8918573e-05
    %v906 = vadd.f32 %v905, 0.001143296
    %v907 = vmul.f32 %v893, %v906
    %v908 = vadd.f32 %v907, 0.014752088
    %v909 = vmul.f32 %v893, %v908
    %v910 = vadd.f32 %v909, 0.112945676
    %v911 = vmul.f32 %v893, %v910
    %v912 = vadd.f32 %v911, 0.4994258
    %v913 = vmul.f32 %v893, %v912
    %v914 = vadd.f32 %v913, 1.0
    %v915 = vrcp.pop %v914
    %v916 = vmul.f32 %v914, %v915
    %v917 = vsub.f32 1.0, %v916
    %v918 = vmul.f32 %v915, %v917
    %v919 = vadd.f32 %v915, %v918
    %vm920 = vweird.f32 %v914
    %vm921 = vweird.f32 %v915
    %vm922 = vmor %vm920, %vm921
    %v923 = vsel %vm922, %v915, %v919
    %v924 = vand.u32 2147483647, %v914
    %vm925 = vcmp.eq.f32.partialorder %v924, 8.507059e+37
    %v926 = vand.u32 %v914, 2147483648
    %v927 = vor.u32 1.1754944e-38, %v926
    %v928 = vsel %vm925, %v927, %v923
    %v929 = vmul.f32 %v904, %v928
    %v930 = vmin.f32 %v929, 1.0
    %v931 = vmax.f32 %v930, -1.0
    %v932 = vadd.f32 %v811, 1.0
    %v933 = vadd.f32 %v851, 1.0
    %v934 = vadd.f32 %v891, 1.0
    %v935 = vadd.f32 %v931, 1.0
    %v936 = vmul.f32 %v764, %v932
    %v937 = vmul.f32 %v765, %v933
    %v938 = vmul.f32 %v766, %v934
    %v939 = vmul.f32 %v767, %v935
    %v940 = vld [vmem:[#allocation7] sm:$0xff]
    %v941 = vld [vmem:[#allocation7 + $0x8] sm:$0xff]
    %v942 = vld [vmem:[#allocation7 + $0x10] sm:$0xff]
    %v943 = vld [vmem:[#allocation7 + $0x18] sm:$0xff]
    %v944 = vld [vmem:[#allocation7 + $0x20] sm:$0xff]
    %v945 = vld [vmem:[#allocation7 + $0x28] sm:$0xff]
    %v946 = vld [vmem:[#allocation7 + $0x30] sm:$0xff]
    %v947 = vld [vmem:[#allocation7 + $0x38] sm:$0xff]
    %v948 = vld [vmem:[#allocation7 + $0x40] sm:$0xff]
    %v949 = vld [vmem:[#allocation7 + $0x48] sm:$0xff]
    %v950 = vld [vmem:[#allocation7 + $0x50] sm:$0xff]
    %v951 = vld [vmem:[#allocation7 + $0x58] sm:$0xff]
    %v952 = vld [vmem:[#allocation7 + $0x60] sm:$0xff]
    %v953 = vld [vmem:[#allocation7 + $0x68] sm:$0xff]
    %v954 = vld [vmem:[#allocation7 + $0x70] sm:$0xff]
    %v955 = vld [vmem:[#allocation7 + $0x78] sm:$0xff]
    %v956 = vld [vmem:[#allocation7 + $0x80] sm:$0xff]
    %v957 = vld [vmem:[#allocation7 + $0x88] sm:$0xff]
    %v958 = vld [vmem:[#allocation7 + $0x90] sm:$0xff]
    %v959 = vld [vmem:[#allocation7 + $0x98] sm:$0xff]
    %v960 = vld [vmem:[#allocation7 + $0xa0] sm:$0xff]
    %v961 = vld [vmem:[#allocation7 + $0xa8] sm:$0xff]
    %v962 = vld [vmem:[#allocation7 + $0xb0] sm:$0xff]
    %v963 = vld [vmem:[#allocation7 + $0xb8] sm:$0xff]
    %v964 = vld [vmem:[#allocation7 + $0xc0] sm:$0xff]
    %v965 = vld [vmem:[#allocation7 + $0xc8] sm:$0xff]
    %v966 = vld [vmem:[#allocation7 + $0xd0] sm:$0xff]
    %v967 = vld [vmem:[#allocation7 + $0xd8] sm:$0xff]
    %v968 = vld [vmem:[#allocation7 + $0xe0] sm:$0xff]
    %v969 = vld [vmem:[#allocation7 + $0xe8] sm:$0xff]
    %v970 = vld [vmem:[#allocation7 + $0xf0] sm:$0xff]
    %v971 = vld [vmem:[#allocation7 + $0xf8] sm:$0xff]
    %v972 = vld [vmem:[#allocation7 + $0x100] sm:$0xff]
    %v973 = vld [vmem:[#allocation7 + $0x108] sm:$0xff]
    %v974 = vld [vmem:[#allocation7 + $0x110] sm:$0xff]
    %v975 = vld [vmem:[#allocation7 + $0x118] sm:$0xff]
    %v976 = vld [vmem:[#allocation7 + $0x120] sm:$0xff]
    %v977 = vld [vmem:[#allocation7 + $0x128] sm:$0xff]
    %v978 = vld [vmem:[#allocation7 + $0x130] sm:$0xff]
    %v979 = vld [vmem:[#allocation7 + $0x138] sm:$0xff]
    %v980 = vld [vmem:[#allocation7 + $0x140] sm:$0xff]
    %v981 = vld [vmem:[#allocation7 + $0x148] sm:$0xff]
    %v982 = vld [vmem:[#allocation7 + $0x150] sm:$0xff]
    %v983 = vld [vmem:[#allocation7 + $0x158] sm:$0xff]
    %v984 = vld [vmem:[#allocation7 + $0x160] sm:$0xff]
    %v985 = vld [vmem:[#allocation7 + $0x168] sm:$0xff]
    %v986 = vld [vmem:[#allocation7 + $0x170] sm:$0xff]
    %v987 = vld [vmem:[#allocation7 + $0x178] sm:$0xff]
    %v988 = vld [vmem:[#allocation7 + $0x180] sm:$0xff]
    %v989 = vld [vmem:[#allocation7 + $0x188] sm:$0xff]
    %v990 = vld [vmem:[#allocation7 + $0x190] sm:$0xff]
    %v991 = vld [vmem:[#allocation7 + $0x198] sm:$0xff]
    %v992 = vld [vmem:[#allocation7 + $0x1a0] sm:$0xff]
    %v993 = vld [vmem:[#allocation7 + $0x1a8] sm:$0xff]
    %v994 = vld [vmem:[#allocation7 + $0x1b0] sm:$0xff]
    %v995 = vld [vmem:[#allocation7 + $0x1b8] sm:$0xff]
    %v996 = vld [vmem:[#allocation7 + $0x1c0] sm:$0xff]
    %v997 = vld [vmem:[#allocation7 + $0x1c8] sm:$0xff]
    %v998 = vld [vmem:[#allocation7 + $0x1d0] sm:$0xff]
    %v999 = vld [vmem:[#allocation7 + $0x1d8] sm:$0xff]
    %v1000 = vld [vmem:[#allocation7 + $0x1e0] sm:$0xff]
    %v1001 = vld [vmem:[#allocation7 + $0x1e8] sm:$0xff]
    %v1002 = vld [vmem:[#allocation7 + $0x1f0] sm:$0xff]
    %v1003 = vld [vmem:[#allocation7 + $0x1f8] sm:$0xff]
    %v1004 = vld [vmem:[%s16] sm:$0x1]
    %v1006 = vperm.slane %v1004, 0
    %1008 = vmatpush.msra.mxu0 %v955
    %1009 = vmatpush.msra.mxu0 %v954
    %1010 = vmatpush.msra.mxu0 %v953
    %1011 = vmatpush.msra.mxu0 %v952
    %1012 = vmatpush.msra.mxu0 %v951
    %1013 = vmatpush.msra.mxu0 %v950
    %1014 = vmatpush.msra.mxu0 %v949
    %1015 = vmatpush.msra.mxu0 %v948
    %1016 = vmatpush.msra.mxu0 %v947
    %1017 = vmatpush.msra.mxu0 %v946
    %1018 = vmatpush.msra.mxu0 %v945
    %1019 = vmatpush.msra.mxu0 %v944
    %1020 = vmatpush.msra.mxu0 %v943
    %1021 = vmatpush.msra.mxu0 %v942
    %1022 = vmatpush.msra.mxu0 %v941
    %1023 = vmatpush.msra.mxu0 %v940
    %1024 = vmatmul.f32.gmra.mxu0 %v936
    %v1025 = vpop.f32.mrf.mxu0
    %v1026 = vadd.f32 %v1006, %v1025
    %1027 = vdwg.mxu0
    %1028 = vmatpush.msra.mxu0 %v971
    %1029 = vmatpush.msra.mxu0 %v970
    %1030 = vmatpush.msra.mxu0 %v969
    %1031 = vmatpush.msra.mxu0 %v968
    %1032 = vmatpush.msra.mxu0 %v967
    %1033 = vmatpush.msra.mxu0 %v966
    %1034 = vmatpush.msra.mxu0 %v965
    %1035 = vmatpush.msra.mxu0 %v964
    %1036 = vmatpush.msra.mxu0 %v963
    %1037 = vmatpush.msra.mxu0 %v962
    %1038 = vmatpush.msra.mxu0 %v961
    %1039 = vmatpush.msra.mxu0 %v960
    %1040 = vmatpush.msra.mxu0 %v959
    %1041 = vmatpush.msra.mxu0 %v958
    %1042 = vmatpush.msra.mxu0 %v957
    %1043 = vmatpush.msra.mxu0 %v956
    %1044 = vmatmul.f32.gmra.mxu0 %v937
    %v1045 = vpop.f32.mrf.mxu0
    %v1046 = vadd.f32 %v1026, %v1045
    %1047 = vdwg.mxu0
    %1048 = vmatpush.msra.mxu0 %v987
    %1049 = vmatpush.msra.mxu0 %v986
    %1050 = vmatpush.msra.mxu0 %v985
    %1051 = vmatpush.msra.mxu0 %v984
    %1052 = vmatpush.msra.mxu0 %v983
    %1053 = vmatpush.msra.mxu0 %v982
    %1054 = vmatpush.msra.mxu0 %v981
    %1055 = vmatpush.msra.mxu0 %v980
    %1056 = vmatpush.msra.mxu0 %v979
    %1057 = vmatpush.msra.mxu0 %v978
    %1058 = vmatpush.msra.mxu0 %v977
    %1059 = vmatpush.msra.mxu0 %v976
    %1060 = vmatpush.msra.mxu0 %v975
    %1061 = vmatpush.msra.mxu0 %v974
    %1062 = vmatpush.msra.mxu0 %v973
    %1063 = vmatpush.msra.mxu0 %v972
    %1064 = vmatmul.f32.gmra.mxu0 %v938
    %v1065 = vpop.f32.mrf.mxu0
    %v1066 = vadd.f32 %v1046, %v1065
    %1067 = vdwg.mxu0
    %1068 = vmatpush.msra.mxu0 %v1003
    %1069 = vmatpush.msra.mxu0 %v1002
    %1070 = vmatpush.msra.mxu0 %v1001
    %1071 = vmatpush.msra.mxu0 %v1000
    %1072 = vmatpush.msra.mxu0 %v999
    %1073 = vmatpush.msra.mxu0 %v998
    %1074 = vmatpush.msra.mxu0 %v997
    %1075 = vmatpush.msra.mxu0 %v996
    %1076 = vmatpush.msra.mxu0 %v995
    %1077 = vmatpush.msra.mxu0 %v994
    %1078 = vmatpush.msra.mxu0 %v993
    %1079 = vmatpush.msra.mxu0 %v992
    %1080 = vmatpush.msra.mxu0 %v991
    %1081 = vmatpush.msra.mxu0 %v990
    %1082 = vmatpush.msra.mxu0 %v989
    %1083 = vmatpush.msra.mxu0 %v988
    %1084 = vmatmul.f32.gmra.mxu0 %v939
    %v1085 = vpop.f32.mrf.mxu0
    %v1086 = vadd.f32 %v1066, %v1085
    %1087 = vdwg.mxu0
    %1088 = vst [vmem:[#allocation11] sm:$0xf] %v1086
    %v1089 = vld [vmem:[%s17] sm:$0xff]
    %v1090 = vld [vmem:[%s17 + $0x8] sm:$0xff]
    %v1091 = vld [vmem:[%s17 + $0x10] sm:$0xff]
    %v1092 = vld [vmem:[%s17 + $0x18] sm:$0xff]
    %v1093 = vld [vmem:[%s18] sm:$0x1]
    %v1095 = vperm.slane %v1093, 0
    %1097 = vmatpush.msra.mxu0 0.0
    %1098 = vmatpush.msra.mxu0 0.0
    %1099 = vmatpush.msra.mxu0 0.0
    %1100 = vmatpush.msra.mxu0 0.0
    %1101 = vmatpush.msra.mxu0 0.0
    %1102 = vmatpush.msra.mxu0 0.0
    %1103 = vmatpush.msra.mxu0 0.0
    %1104 = vmatpush.msra.mxu0 0.0
    %1105 = vmatpush.msra.mxu0 0.0
    %1106 = vmatpush.msra.mxu0 0.0
    %1107 = vmatpush.msra.mxu0 0.0
    %1108 = vmatpush.msra.mxu0 0.0
    %1109 = vmatpush.msra.mxu0 %v1092
    %1110 = vmatpush.msra.mxu0 %v1091
    %1111 = vmatpush.msra.mxu0 %v1090
    %1112 = vmatpush.msra.mxu0 %v1089
    %1113 = vmatmul.f32.gmra.mxu0 %v682
    %v1114 = vpop.f32.mrf.mxu0
    %v1115 = vadd.f32 %v1095, %v1114
    %1116 = vdwg.mxu0
    %v1117 = vmul.f32 %v1115, 0.5
    %v1118 = vmul.f32 %v1115, 0.70710677
    %v1119 = vmul.f32 %v1118, %v1118
    %v1120 = vmin.f32 16.0, %v1119
    %v1121 = vmul.f32 %v1120, 2.1237322e-06
    %v1122 = vadd.f32 %v1121, 0.00028619796
    %v1123 = vmul.f32 %v1120, %v1122
    %v1124 = vadd.f32 %v1123, 0.0036580483
    %v1125 = vmul.f32 %v1120, %v1124
    %v1126 = vadd.f32 %v1125, 0.05243302
    %v1127 = vmul.f32 %v1120, %v1126
    %v1128 = vadd.f32 %v1127, 0.18741608
    %v1129 = vmul.f32 %v1120, %v1128
    %v1130 = vadd.f32 %v1129, 1.1283791
    %v1131 = vmul.f32 %v1118, %v1130
    %v1132 = vmul.f32 %v1120, 3.8918573e-05
    %v1133 = vadd.f32 %v1132, 0.001143296
    %v1134 = vmul.f32 %v1120, %v1133
    %v1135 = vadd.f32 %v1134, 0.014752088
    %v1136 = vmul.f32 %v1120, %v1135
    %v1137 = vadd.f32 %v1136, 0.112945676
    %v1138 = vmul.f32 %v1120, %v1137
    %v1139 = vadd.f32 %v1138, 0.4994258
    %v1140 = vmul.f32 %v1120, %v1139
    %v1141 = vadd.f32 %v1140, 1.0
    %v1142 = vrcp.pop %v1141
    %v1143 = vmul.f32 %v1141, %v1142
    %v1144 = vsub.f32 1.0, %v1143
    %v1145 = vmul.f32 %v1142, %v1144
    %v1146 = vadd.f32 %v1142, %v1145
    %vm1147 = vweird.f32 %v1141
    %vm1148 = vweird.f32 %v1142
    %vm1149 = vmor %vm1147, %vm1148
    %v1150 = vsel %vm1149, %v1142, %v1146
    %v1151 = vand.u32 2147483647, %v1141
    %vm1152 = vcmp.eq.f32.partialorder %v1151, 8.507059e+37
    %v1153 = vand.u32 %v1141, 2147483648
    %v1154 = vor.u32 1.1754944e-38, %v1153
    %v1155 = vsel %vm1152, %v1154, %v1150
    %v1156 = vmul.f32 %v1131, %v1155
    %v1157 = vmin.f32 %v1156, 1.0
    %v1158 = vmax.f32 %v1157, -1.0
    %v1159 = vadd.f32 %v1158, 1.0
    %v1160 = vmul.f32 %v1117, %v1159
    %v1161 = vld [vmem:[%s19] sm:$0x1]
    %v1162 = vld [vmem:[%s20] sm:$0x1]
    %vm1163 = vcmask 125952
    %v1164 = vsel %vm1163, %v1160, 0.0
    %1165 = vadd.xlane.f32.xlu0 %v1164
    %v1166 = vpop.xlane.xlu0 %1165
    %v1167 = vrcp.pop 16.0
    %v1168 = vmul.f32 16.0, %v1167
    %v1169 = vsub.f32 1.0, %v1168
    %v1170 = vmul.f32 %v1167, %v1169
    %v1171 = vadd.f32 %v1167, %v1170
    %vm1172 = vweird.f32 %v1167
    %v1173 = vsel %vm1172, %v1167, %v1171
    %v1174 = vmul.f32 %v1166, %v1173
    %v1175 = vsub.f32 %v1160, %v1174
    %v1176 = vmul.f32 %v1175, %v1175
    %v1177 = vsel %vm1163, %v1176, 0.0
    %1178 = vadd.xlane.f32.xlu0 %v1177
    %v1179 = vpop.xlane.xlu0 %1178
    %v1180 = vmul.f32 %v1179, %v1173
    %v1181 = vadd.f32 %v1180, 1e-05
    %v1182 = vrsqrt.pop %v1181
    %v1183 = vmul.f32 %v1182, %v1181
    %v1184 = vmul.f32 %v1183, %v1182
    %v1185 = vmul.f32 0.5, %v1184
    %v1186 = vsub.f32 1.5, %v1185
    %v1187 = vmul.f32 %v1182, %v1186
    %vm1188 = vweird.f32 %v1181
    %vm1189 = vweird.f32 %v1182
    %vm1190 = vmor %vm1188, %vm1189
    %v1191 = vsel %vm1190, %v1182, %v1187
    %v1192 = vmul.f32 %v1175, %v1191
    %v1194 = vperm.slane %v1161, 0
    %v1196 = vmul.f32 %v1192, %v1194
    %v1198 = vperm.slane %v1162, 0
    %v1200 = vadd.f32 %v1196, %v1198
    %v1201 = vld [vmem:[%s21] sm:$0xff]
    %v1202 = vld [vmem:[%s21 + $0x8] sm:$0xff]
    %v1203 = vld [vmem:[%s22] sm:$0x1]
    %v1205 = vperm.slane %v1203, 0
    %vm1207 = vcmask 130048
    %v1209 = vsel %vm1207, %v1200, 0
    %1211 = vmatpush.msra.mxu0 0.0
    %1212 = vmatpush.msra.mxu0 0.0
    %1213 = vmatpush.msra.mxu0 0.0
    %1214 = vmatpush.msra.mxu0 0.0
    %1215 = vmatpush.msra.mxu0 0.0
    %1216 = vmatpush.msra.mxu0 0.0
    %1217 = vmatpush.msra.mxu0 0.0
    %1218 = vmatpush.msra.mxu0 0.0
    %1219 = vmatpush.msra.mxu0 0.0
    %1220 = vmatpush.msra.mxu0 0.0
    %1221 = vmatpush.msra.mxu0 0.0
    %1222 = vmatpush.msra.mxu0 0.0
    %1223 = vmatpush.msra.mxu0 0.0
    %1224 = vmatpush.msra.mxu0 0.0
    %1225 = vmatpush.msra.mxu0 %v1202
    %1226 = vmatpush.msra.mxu0 %v1201
    %1227 = vmatmul.f32.gmra.mxu0 %v1209
    %v1228 = vpop.f32.mrf.mxu0
    %v1229 = vadd.f32 %v1205, %v1228
    %1230 = vdwg.mxu0
    %vm1231 = vcmask 27648
    %1232 = vst.msk [vmem:[#allocation9] sm:$0xf] %vm1231, %v1229
    %v1233 = vsel %vm1231, %v1229, -inf
    %1234 = vmax.xlane.f32.xlu0 %v1233
    %v1235 = vpop.xlane.xlu0 %1234
    %v1236 = vsub.f32 %v1229, %v1235
    %v1237 = vmul.f32 %v1236, 1.442695
    %v1238 = vpow.pop %v1237
    %v1239 = vsel %vm1231, %v1238, 0.0
    %1240 = vadd.xlane.f32.xlu0 %v1239
    %v1241 = vpop.xlane.xlu0 %1240
    %v1242 = vlog2.pop %v1241
    %v1243 = vmul.f32 %v1242, 0.6931472
    %v1244 = vadd.f32 %v1243, %v1235
    %v1245 = vld [vmem:[%s1] sm:$0xf]
    %v1246 = vmul.f32 %v1245, %v1229
    %v1247 = vsel %vm1231, %v1246, 0.0
    %1248 = vadd.xlane.f32.xlu0 %v1247
    %v1249 = vpop.xlane.xlu0 %1248
    %v1250 = vlaneseq
    %v1251 = vshrl.u32 %v1250, 7
    %vm1252 = vcmp.lt.s32.totalorder %v1251, 2
    %v1253 = vsel %vm1252, 0.5, 0.0
    %v1254 = vsub.f32 %v1244, %v1249
    %v1255 = vmul.f32 %v1253, %v1254
    %v1256 = vsel %vm445, %v1255, 0.0
    %v1257 = vrot.slane %v1256, 4
    %v1258 = vadd.f32 %v1256, %v1257
    %v1259 = vrot.slane %v1258, 2
    %v1260 = vadd.f32 %v1258, %v1259
    %v1261 = vrot.slane %v1260, 1
    %v1262 = vadd.f32 %v1260, %v1261
    %vm1263 = vcmask 0
    %1264 = vst.msk [vmem:[#allocation8] sm:$0x1] %vm1263, %v1262
    // Predicated region
    $region106: #{fwd.1} parent=1 // pred_check
      _
    $region107: #{fwd.1} parent=1 // pred_check_branch
      %1266 = sbr.rel (0) target = $region109
    $region108: #{fwd.1} parent=1 // pred_region
      %1268 = vsyncadd [#allocation4], 0
      %s1270 = sshll.u32 [#allocation8], 4
      %s1271 = int_to_ptr.vmem [resolvable:$true] %s1270
      %s1272 = sshll.u32 %s23, 4
      %s1273 = int_to_ptr.hbm [resolvable:$true] %s1272
      %1275 = dma.vmem_to_hbm [thread:$0]  %s1271, 16, %s1273, [#allocation4]
    $region109: #{fwd.1} parent=1 // pred_fallthru
      _
    // Predicated region
    $region110: #{fwd.1} parent=1 // pred_check
      _
    $region111: #{fwd.1} parent=1 // pred_check_branch
      %1277 = sbr.rel (0) target = $region113
    $region112: #{fwd.1} parent=1 // pred_region
      %1279 = vsyncadd [#allocation10], 0
      %s1281 = sshll.u32 [#allocation9], 4
      %s1282 = int_to_ptr.vmem [resolvable:$true] %s1281
      %s1283 = sshll.u32 %s24, 4
      %s1284 = int_to_ptr.hbm [resolvable:$true] %s1283
      %1286 = dma.vmem_to_hbm [thread:$0]  %s1282, 64, %s1284, [#allocation10]
    $region113: #{fwd.1} parent=1 // pred_fallthru
      _
    // Predicated region
    $region114: #{fwd.1} parent=1 // pred_check
      _
    $region115: #{fwd.1} parent=1 // pred_check_branch
      %1288 = sbr.rel (0) target = $region117
    $region116: #{fwd.1} parent=1 // pred_region
      %1290 = vsyncadd [#allocation10], 0
      %s1292 = sshll.u32 [#allocation11], 4
      %s1293 = int_to_ptr.vmem [resolvable:$true] %s1292
      %s1294 = sshll.u32 %s25, 4
      %s1295 = int_to_ptr.hbm [resolvable:$true] %s1294
      %1297 = dma.vmem_to_hbm [thread:$0]  %s1293, 64, %s1295, [#allocation10]
    $region117: #{fwd.1} parent=1 // pred_fallthru
      _
    // Predicated region
    $region118: #{fwd.1} parent=1 // pred_check
      _
    $region119: #{fwd.1} parent=1 // pred_check_branch
      %1299 = sbr.rel (0) target = $region121
    $region120: #{fwd.1} parent=1 // pred_region
      %1301 = dma.done [#allocation4], 16
    $region121: #{fwd.1} parent=1 // pred_fallthru
      _
    // Predicated region
    $region122: #{fwd.1} parent=1 // pred_check
      _
    $region123: #{fwd.1} parent=1 // pred_check_branch
      %1303 = sbr.rel (0) target = $region125
    $region124: #{fwd.1} parent=1 // pred_region
      %1305 = dma.done [#allocation10], 64
    $region125: #{fwd.1} parent=1 // pred_fallthru
      _
    // Predicated region
    $region126: #{fwd.1} parent=1 // pred_check
      _
    $region127: #{fwd.1} parent=1 // pred_check_branch
      %1307 = sbr.rel (0) target = $region129
    $region128: #{fwd.1} parent=1 // pred_region
      %1309 = dma.done [#allocation10], 64
    $region129: #{fwd.1} parent=1 // pred_fallthru
      _
    %1310 = vsyncpa [#allocation3], 1
    %1311 = vsyncpa [#allocation6], 1
    %1312 = vsyncpa [#allocation4], 1
    %1313 = vsyncpa [#allocation10], 1

</llo_original>
